<compile_context>
chip_gen: v5e
topology: v5e:2x2
jax: 0.10.0
libtpu: 0.0.40
codegen_flags: <defaults>
</compile_context>

<pallas_src>
import functools

import numpy as np

import jax
import jax.numpy as jnp
from jax.experimental import pallas as pl
from jax.experimental.pallas import tpu as pltpu


MATMUL_DTYPE = jnp.bfloat16        # MXU operand dtype; set jnp.float32 for strict f32
_LN_EPS = 1e-5


def _tpu_vmem_capacity_bytes():
    try:
        return int(pltpu.get_tpu_info().vmem_capacity_bytes)
    except Exception:
        return 64 * 1024 * 1024    # assume the smallest (v7x) when unknown


_VMEM_CAP = _tpu_vmem_capacity_bytes()
if _VMEM_CAP >= 100 * 1024 * 1024:          # v5e / v6e: 128 MiB physical VMEM
    _VMEM_LIMIT_BYTES = 100 * 1024 * 1024
    _MAX_ROW_TILE = 1024
else:                                        # v7x: 64 MiB physical VMEM
    _VMEM_LIMIT_BYTES = 48 * 1024 * 1024
    _MAX_ROW_TILE = 512


# ----------------------------------------------------------------------------- #
# small helpers
# ----------------------------------------------------------------------------- #
def _mx(x):
    return x.astype(MATMUL_DTYPE)


def _f32dot(a, b):
    return jnp.dot(a, b, preferred_element_type=jnp.float32)


def _layer_norm(x, gamma, beta, eps):
    mu = jnp.mean(x, axis=-1, keepdims=True)
    xc = x - mu
    var = jnp.mean(xc * xc, axis=-1, keepdims=True)
    return xc * jax.lax.rsqrt(var + eps) * gamma + beta


def _cparams(semantics):
    return pltpu.CompilerParams(
        dimension_semantics=tuple(semantics),
        vmem_limit_bytes=_VMEM_LIMIT_BYTES,
    )


def _row_tile(m, max_rows):
    """Largest row tile that divides m (multiple of 8 when actually tiling)."""
    if m <= max_rows:
        return m
    t = max_rows - max_rows % 8
    while t >= 8:
        if m % t == 0:
            return t
        t -= 8
    return m


def _hidden_tile(hidden, max_tile=512):
    """Largest multiple-of-128 divisor of hidden (<= max_tile), else full hidden."""
    if hidden <= max_tile:
        return hidden
    t = max_tile - max_tile % 128
    while t >= 128:
        if hidden % t == 0:
            return t
        t -= 128
    return hidden


def _const_spec(arr):
    nd = arr.ndim
    return pl.BlockSpec(arr.shape, lambda *_: (0,) * nd)


# ----------------------------------------------------------------------------- #
# Pallas kernels
# ----------------------------------------------------------------------------- #
def _causal_attn_kernel(x_ref, wkf_ref, bkf_ref, wv_ref, bv_ref, mkv_ref,
                        wcol_ref, tril_ref, wfc_ref, bfc_ref, gam_ref, bet_ref,
                        o_ref, *, eps, chunk):
    """Fused per-batch causal Performer self-attention block:
    key-feature map + value projection + causal combine + fc + residual + LayerNorm.
    (Query features cancel exactly in the reference math, so they are skipped.)"""
    x = x_ref[0]                                                   # (S, E) f32
    xb = _mx(x)
    kf = jnp.maximum(_f32dot(xb, wkf_ref[...]) + bkf_ref[...], 0.0) + 0.001   # (S, H*F)
    vp = _f32dot(xb, wv_ref[...]) + bv_ref[...]                                # (S, E)

    # ksum[f] = sum_q cumsum_k(kf)[q,f] = sum_k (S-k)*kf[k,f]
    ksum = jnp.sum(kf * wcol_ref[...], axis=0, keepdims=True)                  # (1, H*F)
    inv_ksum = pl.reciprocal(ksum, approx=True)
    # c_e[k, e] = sum_{f in head(e)} kf[k,f] / ksum[f]   (one block-diag matmul)
    c_e = _f32dot(_mx(kf * inv_ksum), mkv_ref[...])                            # (S, E)
    wv_all = c_e * vp                                                          # (S, E) f32

    s = x.shape[0]
    n_full = s // chunk
    rem = s - n_full * chunk
    tril = tril_ref[...]                                                       # f32 0/1
    wfc = wfc_ref[...]
    bfc = bfc_ref[...]
    gam = gam_ref[...]
    bet = bet_ref[...]

    # Chunked causal prefix-sum over keys; the prefix matmul is kept in f32 so the
    # value operand is not re-quantised.  The fc + residual + LN epilogue is applied
    # per chunk and stored directly -> no (S, E) concatenate, mask stays (chunk, chunk).
    carry = jnp.zeros((1, wv_all.shape[1]), jnp.float32)
    off = 0
    for _ in range(n_full):
        blk = wv_all[off:off + chunk]
        pref = _f32dot(tril, blk) + carry
        carry = carry + jnp.sum(blk, axis=0, keepdims=True)
        y = _f32dot(_mx(pref), wfc) + bfc + x[off:off + chunk]
        o_ref[0, off:off + chunk] = _layer_norm(y, gam, bet, eps)
        off += chunk
    if rem:
        blk = wv_all[off:off + rem]
        pref = _f32dot(tril[:rem, :rem], blk) + carry
        y = _f32dot(_mx(pref), wfc) + bfc + x[off:off + rem]
        o_ref[0, off:off + rem] = _layer_norm(y, gam, bet, eps)


def _bidir_attn_kernel(q_ref, k_ref, v_ref, wqf_ref, bqf_ref, wkf_ref, bkf_ref,
                       wv_ref, bv_ref, mkv_ref, wfc_ref, bfc_ref, gam_ref,
                       bet_ref, o_ref, *, eps):
    """Fused per-batch bidirectional Performer cross-attention block:
    q/k feature maps + value projection + combine + fc + residual + LayerNorm."""
    q = q_ref[0]                                                    # (Sq, E) f32
    k = k_ref[0]                                                    # (Sk, E)
    v = v_ref[0]                                                    # (Sk, E)
    qb, kb, vb = _mx(q), _mx(k), _mx(v)

    qf = jnp.maximum(_f32dot(qb, wqf_ref[...]) + bqf_ref[...], 0.0) + 0.001   # (Sq, H*F)
    kf = jnp.maximum(_f32dot(kb, wkf_ref[...]) + bkf_ref[...], 0.0) + 0.001   # (Sk, H*F)
    vp = _f32dot(vb, wv_ref[...]) + bv_ref[...]                                # (Sk, E)

    ksum = jnp.sum(kf, axis=0, keepdims=True)                                  # (1, H*F)
    # denom_e[s, e] = sum_{f in head(e)} qf[s,f] * ksum[f]   (block-diag matmul)
    denom = _f32dot(_mx(qf * ksum), mkv_ref[...])                              # (Sq, E)
    norm = pl.reciprocal(denom, approx=True)

    # kv[f, d] = sum_k kf[k,f] * vp[k,d]   (contract dim 0 of both, no transpose)
    kv = jax.lax.dot_general(_mx(kf), _mx(vp), (((0,), (0,)), ((), ())),
                             preferred_element_type=jnp.float32)               # (H*F, E)
    kv_m = _mx(kv) * mkv_ref[...]                                              # masked, bf16
    attn = _f32dot(_mx(qf), kv_m) * norm                                       # (Sq, E)

    y = _f32dot(_mx(attn), wfc_ref[...]) + bfc_ref[...] + q
    o_ref[0] = _layer_norm(y, gam_ref[...], bet_ref[...], eps)


def _ffn_add_ln_kernel(x_ref, w1T_ref, b1_ref, w2T_ref, b2_ref, gam_ref,
                       bet_ref, o_ref, acc_ref, *, eps):
    """Fused FFN (Linear -> GELU -> Linear) + residual add + LayerNorm over a row
    tile, with the hidden dimension tiled on a reduction grid axis (f32 acc)."""
    j = pl.program_id(1)

    @pl.when(j == 0)
    def _():
        acc_ref[...] = jnp.zeros_like(acc_ref)

    x = x_ref[...]
    h = _f32dot(_mx(x), w1T_ref[...]) + b1_ref[...]
    # TODO(synk): PyTorch nn.GELU() defaults to the exact erf form; tanh approximation used here.
    h = jax.nn.gelu(h, approximate=True)
    acc_ref[...] += _f32dot(_mx(h), w2T_ref[...])

    @pl.when(j == pl.num_programs(1) - 1)
    def _():
        y = acc_ref[...] + b2_ref[...] + x
        o_ref[...] = _layer_norm(y, gam_ref[...], bet_ref[...], eps)


# ----------------------------------------------------------------------------- #
# pallas_call wrappers
# ----------------------------------------------------------------------------- #
def _causal_self_attention(x, p, ln_g, ln_b):
    b_, s, e = x.shape
    chunk = min(s, 128)
    tril = jnp.asarray(np.tril(np.ones((chunk, chunk), np.float32)))
    wcol = jnp.asarray(np.arange(s, 0, -1, dtype=np.float32).reshape(s, 1))
    seq_spec = lambda last: pl.BlockSpec((1, s, last), lambda i: (i, 0, 0))
    return pl.pallas_call(
        functools.partial(_causal_attn_kernel, eps=_LN_EPS, chunk=chunk),
        out_shape=jax.ShapeDtypeStruct((b_, s, e), jnp.float32),
        grid=(b_,),
        in_specs=[seq_spec(e),
                  _const_spec(p["wk_feat"]), _const_spec(p["bk_feat"]),
                  _const_spec(p["wv_bd"]), _const_spec(p["bv_bd"]),
                  _const_spec(p["mkv"]), _const_spec(wcol), _const_spec(tril),
                  _const_spec(p["wfc_t"]), _const_spec(p["bfc"]),
                  _const_spec(ln_g), _const_spec(ln_b)],
        out_specs=seq_spec(e),
        compiler_params=_cparams(("parallel",)),
    )(x, p["wk_feat"], p["bk_feat"], p["wv_bd"], p["bv_bd"], p["mkv"],
      wcol, tril, p["wfc_t"], p["bfc"], ln_g, ln_b)


def _cross_attention(q, k, v, p, ln_g, ln_b):
    b_, sq, e = q.shape
    sk = k.shape[1]
    q_spec = lambda last: pl.BlockSpec((1, sq, last), lambda i: (i, 0, 0))
    k_spec = lambda last: pl.BlockSpec((1, sk, last), lambda i: (i, 0, 0))
    return pl.pallas_call(
        functools.partial(_bidir_attn_kernel, eps=_LN_EPS),
        out_shape=jax.ShapeDtypeStruct((b_, sq, e), jnp.float32),
        grid=(b_,),
        in_specs=[q_spec(e), k_spec(e), k_spec(e),
                  _const_spec(p["wq_feat"]), _const_spec(p["bq_feat"]),
                  _const_spec(p["wk_feat"]), _const_spec(p["bk_feat"]),
                  _const_spec(p["wv_bd"]), _const_spec(p["bv_bd"]),
                  _const_spec(p["mkv"]),
                  _const_spec(p["wfc_t"]), _const_spec(p["bfc"]),
                  _const_spec(ln_g), _const_spec(ln_b)],
        out_specs=q_spec(e),
        compiler_params=_cparams(("parallel",)),
    )(q, k, v, p["wq_feat"], p["bq_feat"], p["wk_feat"], p["bk_feat"],
      p["wv_bd"], p["bv_bd"], p["mkv"], p["wfc_t"], p["bfc"], ln_g, ln_b)


def _ffn_add_ln(x, w1T, b1, w2T, b2, ln_g, ln_b):
    b_, s, e = x.shape
    m = b_ * s
    x2 = x.reshape(m, e)
    hidden = w1T.shape[1]
    tm = _row_tile(m, _MAX_ROW_TILE)
    th = _hidden_tile(hidden)
    out = pl.pallas_call(
        functools.partial(_ffn_add_ln_kernel, eps=_LN_EPS),
        out_shape=jax.ShapeDtypeStruct((m, e), jnp.float32),
        grid=(m // tm, hidden // th),
        in_specs=[pl.BlockSpec((tm, e), lambda i, j: (i, 0)),
                  pl.BlockSpec((e, th), lambda i, j: (0, j)),
                  pl.BlockSpec((1, th), lambda i, j: (0, j)),
                  pl.BlockSpec((th, e), lambda i, j: (j, 0)),
                  pl.BlockSpec((1, e), lambda i, j: (0, 0)),
                  pl.BlockSpec((1, e), lambda i, j: (0, 0)),
                  pl.BlockSpec((1, e), lambda i, j: (0, 0))],
        out_specs=pl.BlockSpec((tm, e), lambda i, j: (i, 0)),
        scratch_shapes=[pltpu.VMEM((tm, e), jnp.float32)],
        compiler_params=_cparams(("parallel", "arbitrary")),
    )(x2, w1T, b1, w2T, b2, ln_g, ln_b)
    return out.reshape(b_, s, e)


def decoder_block_forward(prep, query, key, value):
    """DecoderBlock.forward.  masked_fill in the reference is a no-op (not
    in-place) and dropout is identity in eval mode."""
    q2 = _causal_self_attention(query, prep["attn1"],
                                prep["norm_g"], prep["norm_b"])
    reg = _cross_attention(q2, key, value, prep["attn2"],
                           prep["pb_ln1_g"], prep["pb_ln1_b"])
    out = _ffn_add_ln(reg, prep["pb_w1_t"], prep["pb_b1"],
                      prep["pb_w2_t"], prep["pb_b2"],
                      prep["pb_ln2_g"], prep["pb_ln2_b"])
    return out


# ----------------------------------------------------------------------------- #
# One-time host-side weight preprocessing
# ----------------------------------------------------------------------------- #
def prepare_decoder_params(params, head):
    """Transpose all weights to (in, out) layout, FOLD the per-head depth
    projection + 1/depth**0.25 scale into the ORF, block-diagonalise so all heads
    are one lane-dense matmul, and pre-cast matmul weights to MATMUL_DTYPE."""
    def prep_attn(p):
        d = p["wq"].shape[0]
        f = p["qorf"].shape[0]
        scale = 1.0 / (float(d) ** 0.25)                  # ORF.shape[-1] == depth
        eye = jnp.eye(head, dtype=jnp.float32)
        wq_feat = (p["wq"].T @ p["qorf"].T) * scale       # (d, F)
        bq_feat = (p["bq"] @ p["qorf"].T) * scale         # (1, F)
        wk_feat = (p["wk"].T @ p["korf"].T) * scale
        bk_feat = (p["bk"] @ p["korf"].T) * scale
        return dict(
            wq_feat=_mx(jnp.kron(eye, wq_feat)),          # (E, H*F) folded feature weight
            bq_feat=jnp.tile(bq_feat, (1, head)),         # (1, H*F) f32
            wk_feat=_mx(jnp.kron(eye, wk_feat)),
            bk_feat=jnp.tile(bk_feat, (1, head)),
            wv_bd=_mx(jnp.kron(eye, p["wv"].T)),          # (E, E) block-diag value proj
            bv_bd=jnp.tile(p["bv"], (1, head)),           # (1, E) f32
            mkv=_mx(jnp.kron(eye, jnp.ones((f, d), jnp.float32))),   # (H*F, E) 0/1
            wfc_t=_mx(p["wfc"].T), bfc=p["bfc"],
        )

    return dict(
        attn1=prep_attn(params["attn1"]),
        attn2=prep_attn(params["attn2"]),
        norm_g=params["norm_g"], norm_b=params["norm_b"],
        pb_ln1_g=params["pb_ln1_g"], pb_ln1_b=params["pb_ln1_b"],
        pb_ln2_g=params["pb_ln2_g"], pb_ln2_b=params["pb_ln2_b"],
        pb_w1_t=_mx(params["pb_w1"].T), pb_b1=params["pb_b1"],
        pb_w2_t=_mx(params["pb_w2"].T), pb_b2=params["pb_b2"],
    )


# ----------------------------------------------------------------------------- #
# Deterministic parameter construction (mirrors the PyTorch module init)
# ----------------------------------------------------------------------------- #
def _init_linear(key, out_dim, in_dim):
    kw, kb = jax.random.split(key)
    bound = 1.0 / (in_dim ** 0.5)
    w = jax.random.uniform(kw, (out_dim, in_dim), jnp.float32, -bound, bound)
    b = jax.random.uniform(kb, (1, out_dim), jnp.float32, -bound, bound)
    return w, b


def _make_orf(key, depth, n_features):
    n = n_features // depth
    rem = n_features % depth
    n_blocks = n + (1 if rem > 0 else 0)
    keys = jax.random.split(key, n_blocks + 1)
    feats = []
    for i in range(n):
        m = jax.random.uniform(keys[i], (depth, depth), jnp.float32)
        qm, _ = jnp.linalg.qr(m)
        feats.append(qm)
    if rem > 0:
        m = jax.random.uniform(keys[n], (depth, depth), jnp.float32)
        qm, _ = jnp.linalg.qr(m)
        feats.append(qm[:rem])
    orth = jnp.concatenate(feats, axis=0)                     # (n_features, depth)
    mult = jnp.linalg.norm(
        jax.random.normal(keys[-1], (n_features, depth), jnp.float32), axis=1)
    return mult[:, None] * orth


def _init_fast_attention(key, e, head, n_features):
    d = e // head
    k = jax.random.split(key, 6)
    wq, bq = _init_linear(k[0], d, d)
    wk_, bk = _init_linear(k[1], d, d)
    wv, bv = _init_linear(k[2], d, d)
    wfc, bfc = _init_linear(k[3], e, e)
    return dict(wq=wq, bq=bq, wk=wk_, bk=bk, wv=wv, bv=bv, wfc=wfc, bfc=bfc,
                qorf=_make_orf(k[4], d, n_features),
                korf=_make_orf(k[5], d, n_features))


def init_decoder_block(key, e, head, n_features, forward_expansion):
    k = jax.random.split(key, 4)
    w1, b1 = _init_linear(k[2], e * forward_expansion, e)
    w2, b2 = _init_linear(k[3], e, e * forward_expansion)
    ones = jnp.ones((1, e), jnp.float32)
    zeros = jnp.zeros((1, e), jnp.float32)
    return dict(
        attn1=_init_fast_attention(k[0], e, head, n_features),
        attn2=_init_fast_attention(k[1], e, head, n_features),
        norm_g=ones, norm_b=zeros,
        pb_ln1_g=ones, pb_ln1_b=zeros,
        pb_ln2_g=ones, pb_ln2_b=zeros,
        pb_w1=w1, pb_b1=b1, pb_w2=w2, pb_b2=b2,
    )


# ----------------------------------------------------------------------------- #
# Pure-JAX f32 reference (literal transcription of the PyTorch module)
# ----------------------------------------------------------------------------- #
def _ref_fast_attention(p, q, k, v, head, causal):
    b, sq, e = q.shape
    sk = k.shape[1]
    d = e // head

    def split(x, s):
        return x.reshape(b, s, head, d).transpose(0, 2, 1, 3)

    qh, kh, vh = split(q, sq), split(k, sk), split(v, sk)
    qp = qh @ p["wq"].T + p["bq"]
    kp = kh @ p["wk"].T + p["bk"]
    vp = vh @ p["wv"].T + p["bv"]
    sc = 1.0 / (float(d) ** 0.25)            # ORF.shape[-1] == depth
    qf = jnp.maximum(jnp.einsum("nhsd,fd->nhsf", qp * sc, p["qorf"]), 0.0) + 0.001
    kf = jnp.maximum(jnp.einsum("nhsd,fd->nhsf", kp * sc, p["korf"]), 0.0) + 0.001
    if causal:
        denom = 1.0 / jnp.einsum("nhqf,nhkf->nhqf", qf, jnp.cumsum(kf, axis=-2))
        x = jnp.einsum("nhkf,nhkd->nhkfd", kf, vp)
        x = jnp.cumsum(x, axis=-3)
        out = jnp.einsum("nhqfd,nhqf,nhqf->nhqd", x, qf, denom)
    else:
        kt = jnp.einsum("nhkf->nhf", kf)
        norm = 1.0 / jnp.einsum("nhqf,nhf->nhq", qf, kt)
        kv = jnp.einsum("nhkf,nhkd->nhfd", kf, vp)
        out = jnp.einsum("nhfd,nhqf,nhq->nhqd", kv, qf, norm)
    out = out.transpose(0, 2, 1, 3).reshape(b, sq, e)
    return out @ p["wfc"].T + p["bfc"]


def _ref_ln(x, g, b, eps=_LN_EPS):
    mu = jnp.mean(x, -1, keepdims=True)
    var = jnp.mean((x - mu) ** 2, -1, keepdims=True)
    return (x - mu) * jax.lax.rsqrt(var + eps) * g + b


def _ref_forward(params, q, k, v, head):
    a1 = _ref_fast_attention(params["attn1"], q, q, q, head, True)
    q2 = _ref_ln(a1 + q, params["norm_g"], params["norm_b"])
    a2 = _ref_fast_attention(params["attn2"], q2, k, v, head, False)
    reg = _ref_ln(a2 + q2, params["pb_ln1_g"], params["pb_ln1_b"])
    h = jax.nn.gelu(reg @ params["pb_w1"].T + params["pb_b1"], approximate=True)
    ff = h @ params["pb_w2"].T + params["pb_b2"]
    return _ref_ln(ff + reg, params["pb_ln2_g"], params["pb_ln2_b"])


# ----------------------------------------------------------------------------- #
if __name__ == "__main__":
    B, S, E = 2, 8, 32
    HEAD, N_FEATURES, FWD_EXP = 4, 16, 2

    root = jax.random.PRNGKey(0)
    kp, kq, kk, kv = jax.random.split(root, 4)
    params = init_decoder_block(kp, E, HEAD, N_FEATURES, FWD_EXP)

    query = jax.random.normal(kq, (B, S, E), jnp.float32)
    key = jax.random.normal(kk, (B, S, E), jnp.float32)
    value = jax.random.normal(kv, (B, S, E), jnp.float32)

    prep = prepare_decoder_params(params, HEAD)
    fwd = jax.jit(decoder_block_forward)
    out = jax.block_until_ready(fwd(prep, query, key, value))

    ref = jax.block_until_ready(_ref_forward(params, query, key, value, HEAD))
    assert out.shape == (B, S, E)
    # Kernels use bf16 MXU operands with f32 accumulation (per perf review); the
    # tolerance vs. the strict f32 reference is sized accordingly.  Set
    # MATMUL_DTYPE = jnp.float32 above for ~1e-5-level agreement.
    assert bool(jnp.allclose(out, ref, rtol=5e-2, atol=5e-2)), "mismatch vs reference"

    print("KERNEL_OK")
</pallas_src>

<mosaic_0001>
module attributes {stable_mosaic.version = 11 : i64} {
  func.func @_bidir_attn_kernel(%arg0: i32, %arg1: memref<1x8x32xf32, #tpu.memory_space<vmem>>, %arg2: memref<1x8x32xf32, #tpu.memory_space<vmem>>, %arg3: memref<1x8x32xf32, #tpu.memory_space<vmem>>, %arg4: memref<32x64xbf16, #tpu.memory_space<vmem>>, %arg5: memref<1x64xf32, #tpu.memory_space<vmem>>, %arg6: memref<32x64xbf16, #tpu.memory_space<vmem>>, %arg7: memref<1x64xf32, #tpu.memory_space<vmem>>, %arg8: memref<32x32xbf16, #tpu.memory_space<vmem>>, %arg9: memref<1x32xf32, #tpu.memory_space<vmem>>, %arg10: memref<64x32xbf16, #tpu.memory_space<vmem>>, %arg11: memref<32x32xbf16, #tpu.memory_space<vmem>>, %arg12: memref<1x32xf32, #tpu.memory_space<vmem>>, %arg13: memref<1x32xf32, #tpu.memory_space<vmem>>, %arg14: memref<1x32xf32, #tpu.memory_space<vmem>>, %arg15: memref<1x8x32xf32, #tpu.memory_space<vmem>>) attributes {dimension_semantics = [#tpu.dimension_semantics<parallel>], iteration_bounds = array<i64: 2>, scalar_prefetch = 0 : i64, scratch_operands = 0 : i64, tpu.core_type = #tpu.core_type<tc>, window_params = [{transform_indices = @transform_0, window_bounds = array<i64: 1, 8, 32>}, {transform_indices = @transform_1, window_bounds = array<i64: 1, 8, 32>}, {transform_indices = @transform_2, window_bounds = array<i64: 1, 8, 32>}, {pipeline_mode = #tpu.pipeline_mode<synchronous>, transform_indices = @transform_3, window_bounds = array<i64: 32, 64>}, {pipeline_mode = #tpu.pipeline_mode<synchronous>, transform_indices = @transform_4, window_bounds = array<i64: 1, 64>}, {pipeline_mode = #tpu.pipeline_mode<synchronous>, transform_indices = @transform_5, window_bounds = array<i64: 32, 64>}, {pipeline_mode = #tpu.pipeline_mode<synchronous>, transform_indices = @transform_6, window_bounds = array<i64: 1, 64>}, {pipeline_mode = #tpu.pipeline_mode<synchronous>, transform_indices = @transform_7, window_bounds = array<i64: 32, 32>}, {pipeline_mode = #tpu.pipeline_mode<synchronous>, transform_indices = @transform_8, window_bounds = array<i64: 1, 32>}, {pipeline_mode = #tpu.pipeline_mode<synchronous>, transform_indices = @transform_9, window_bounds = array<i64: 64, 32>}, {pipeline_mode = #tpu.pipeline_mode<synchronous>, transform_indices = @transform_10, window_bounds = array<i64: 32, 32>}, {pipeline_mode = #tpu.pipeline_mode<synchronous>, transform_indices = @transform_11, window_bounds = array<i64: 1, 32>}, {pipeline_mode = #tpu.pipeline_mode<synchronous>, transform_indices = @transform_12, window_bounds = array<i64: 1, 32>}, {pipeline_mode = #tpu.pipeline_mode<synchronous>, transform_indices = @transform_13, window_bounds = array<i64: 1, 32>}, {transform_indices = @transform_14, window_bounds = array<i64: 1, 8, 32>}]} {
    %c0 = arith.constant 0 : index
    %c0_0 = arith.constant 0 : index
    %c0_1 = arith.constant 0 : index
    %0 = vector.load %arg1[%c0, %c0_0, %c0_1] : memref<1x8x32xf32, #tpu.memory_space<vmem>>, vector<1x8x32xf32>
    %1 = vector.shape_cast %0 : vector<1x8x32xf32> to vector<8x32xf32>
    %c0_2 = arith.constant 0 : index
    %c0_3 = arith.constant 0 : index
    %c0_4 = arith.constant 0 : index
    %2 = vector.load %arg2[%c0_2, %c0_3, %c0_4] : memref<1x8x32xf32, #tpu.memory_space<vmem>>, vector<1x8x32xf32>
    %3 = vector.shape_cast %2 : vector<1x8x32xf32> to vector<8x32xf32>
    %c0_5 = arith.constant 0 : index
    %c0_6 = arith.constant 0 : index
    %c0_7 = arith.constant 0 : index
    %4 = vector.load %arg3[%c0_5, %c0_6, %c0_7] : memref<1x8x32xf32, #tpu.memory_space<vmem>>, vector<1x8x32xf32>
    %5 = vector.shape_cast %4 : vector<1x8x32xf32> to vector<8x32xf32>
    %6 = arith.truncf %1 : vector<8x32xf32> to vector<8x32xbf16>
    %7 = arith.truncf %3 : vector<8x32xf32> to vector<8x32xbf16>
    %8 = arith.truncf %5 : vector<8x32xf32> to vector<8x32xbf16>
    %c0_8 = arith.constant 0 : index
    %c0_9 = arith.constant 0 : index
    %9 = vector.load %arg4[%c0_8, %c0_9] : memref<32x64xbf16, #tpu.memory_space<vmem>>, vector<32x64xbf16>
    %cst = arith.constant dense<0.000000e+00> : vector<8x64xf32>
    %10 = tpu.matmul %6, %9, %cst {dimension_numbers = #tpu.dot_dimension_numbers<[1], [0], [0], [1], [0, 0, 1, 1], [], []>} : vector<8x32xbf16>, vector<32x64xbf16>, vector<8x64xf32> -> vector<8x64xf32>
    %c0_10 = arith.constant 0 : index
    %c0_11 = arith.constant 0 : index
    %11 = vector.load %arg5[%c0_10, %c0_11] : memref<1x64xf32, #tpu.memory_space<vmem>>, vector<1x64xf32>
    %12 = vector.broadcast %11 : vector<1x64xf32> to vector<8x64xf32>
    %13 = arith.addf %10, %12 : vector<8x64xf32>
    %cst_12 = arith.constant 0.000000e+00 : f32
    %14 = vector.broadcast %cst_12 : f32 to vector<8x64xf32>
    %15 = arith.maximumf %13, %14 : vector<8x64xf32>
    %cst_13 = arith.constant 1.000000e-03 : f32
    %16 = vector.broadcast %cst_13 : f32 to vector<8x64xf32>
    %17 = arith.addf %15, %16 : vector<8x64xf32>
    %c0_14 = arith.constant 0 : index
    %c0_15 = arith.constant 0 : index
    %18 = vector.load %arg6[%c0_14, %c0_15] : memref<32x64xbf16, #tpu.memory_space<vmem>>, vector<32x64xbf16>
    %cst_16 = arith.constant dense<0.000000e+00> : vector<8x64xf32>
    %19 = tpu.matmul %7, %18, %cst_16 {dimension_numbers = #tpu.dot_dimension_numbers<[1], [0], [0], [1], [0, 0, 1, 1], [], []>} : vector<8x32xbf16>, vector<32x64xbf16>, vector<8x64xf32> -> vector<8x64xf32>
    %c0_17 = arith.constant 0 : index
    %c0_18 = arith.constant 0 : index
    %20 = vector.load %arg7[%c0_17, %c0_18] : memref<1x64xf32, #tpu.memory_space<vmem>>, vector<1x64xf32>
    %21 = vector.broadcast %20 : vector<1x64xf32> to vector<8x64xf32>
    %22 = arith.addf %19, %21 : vector<8x64xf32>
    %cst_19 = arith.constant 0.000000e+00 : f32
    %23 = vector.broadcast %cst_19 : f32 to vector<8x64xf32>
    %24 = arith.maximumf %22, %23 : vector<8x64xf32>
    %cst_20 = arith.constant 1.000000e-03 : f32
    %25 = vector.broadcast %cst_20 : f32 to vector<8x64xf32>
    %26 = arith.addf %24, %25 : vector<8x64xf32>
    %c0_21 = arith.constant 0 : index
    %c0_22 = arith.constant 0 : index
    %27 = vector.load %arg8[%c0_21, %c0_22] : memref<32x32xbf16, #tpu.memory_space<vmem>>, vector<32x32xbf16>
    %cst_23 = arith.constant dense<0.000000e+00> : vector<8x32xf32>
    %28 = tpu.matmul %8, %27, %cst_23 {dimension_numbers = #tpu.dot_dimension_numbers<[1], [0], [0], [1], [0, 0, 1, 1], [], []>} : vector<8x32xbf16>, vector<32x32xbf16>, vector<8x32xf32> -> vector<8x32xf32>
    %c0_24 = arith.constant 0 : index
    %c0_25 = arith.constant 0 : index
    %29 = vector.load %arg9[%c0_24, %c0_25] : memref<1x32xf32, #tpu.memory_space<vmem>>, vector<1x32xf32>
    %30 = vector.broadcast %29 : vector<1x32xf32> to vector<8x32xf32>
    %31 = arith.addf %28, %30 : vector<8x32xf32>
    %cst_26 = arith.constant dense<0.000000e+00> : vector<64xf32>
    %32 = vector.multi_reduction <add>, %26, %cst_26 [0] : vector<8x64xf32> to vector<64xf32>
    %33 = vector.shape_cast %32 : vector<64xf32> to vector<1x64xf32>
    %34 = vector.broadcast %33 : vector<1x64xf32> to vector<8x64xf32>
    %35 = arith.mulf %17, %34 : vector<8x64xf32>
    %36 = arith.truncf %35 : vector<8x64xf32> to vector<8x64xbf16>
    %c0_27 = arith.constant 0 : index
    %c0_28 = arith.constant 0 : index
    %37 = vector.load %arg10[%c0_27, %c0_28] : memref<64x32xbf16, #tpu.memory_space<vmem>>, vector<64x32xbf16>
    %cst_29 = arith.constant dense<0.000000e+00> : vector<8x32xf32>
    %38 = tpu.matmul %36, %37, %cst_29 {dimension_numbers = #tpu.dot_dimension_numbers<[1], [0], [0], [1], [0, 0, 1, 1], [], []>} : vector<8x64xbf16>, vector<64x32xbf16>, vector<8x32xf32> -> vector<8x32xf32>
    %39 = tpu.reciprocal %38 {approx = true} : vector<8x32xf32> -> vector<8x32xf32>
    %40 = arith.truncf %26 : vector<8x64xf32> to vector<8x64xbf16>
    %41 = arith.truncf %31 : vector<8x32xf32> to vector<8x32xbf16>
    %cst_30 = arith.constant dense<0.000000e+00> : vector<64x32xf32>
    %42 = tpu.matmul %40, %41, %cst_30 {dimension_numbers = #tpu.dot_dimension_numbers<[0], [0], [1], [1], [0, 1, 1, 1], [], []>} : vector<8x64xbf16>, vector<8x32xbf16>, vector<64x32xf32> -> vector<64x32xf32>
    %43 = arith.truncf %42 : vector<64x32xf32> to vector<64x32xbf16>
    %c0_31 = arith.constant 0 : index
    %c0_32 = arith.constant 0 : index
    %44 = vector.load %arg10[%c0_31, %c0_32] : memref<64x32xbf16, #tpu.memory_space<vmem>>, vector<64x32xbf16>
    %45 = arith.mulf %43, %44 : vector<64x32xbf16>
    %46 = arith.truncf %17 : vector<8x64xf32> to vector<8x64xbf16>
    %cst_33 = arith.constant dense<0.000000e+00> : vector<8x32xf32>
    %47 = tpu.matmul %46, %45, %cst_33 {dimension_numbers = #tpu.dot_dimension_numbers<[1], [0], [0], [1], [0, 0, 1, 1], [], []>} : vector<8x64xbf16>, vector<64x32xbf16>, vector<8x32xf32> -> vector<8x32xf32>
    %48 = arith.mulf %47, %39 : vector<8x32xf32>
    %49 = arith.truncf %48 : vector<8x32xf32> to vector<8x32xbf16>
    %c0_34 = arith.constant 0 : index
    %c0_35 = arith.constant 0 : index
    %50 = vector.load %arg11[%c0_34, %c0_35] : memref<32x32xbf16, #tpu.memory_space<vmem>>, vector<32x32xbf16>
    %cst_36 = arith.constant dense<0.000000e+00> : vector<8x32xf32>
    %51 = tpu.matmul %49, %50, %cst_36 {dimension_numbers = #tpu.dot_dimension_numbers<[1], [0], [0], [1], [0, 0, 1, 1], [], []>} : vector<8x32xbf16>, vector<32x32xbf16>, vector<8x32xf32> -> vector<8x32xf32>
    %c0_37 = arith.constant 0 : index
    %c0_38 = arith.constant 0 : index
    %52 = vector.load %arg12[%c0_37, %c0_38] : memref<1x32xf32, #tpu.memory_space<vmem>>, vector<1x32xf32>
    %53 = vector.broadcast %52 : vector<1x32xf32> to vector<8x32xf32>
    %54 = arith.addf %51, %53 : vector<8x32xf32>
    %55 = arith.addf %54, %1 : vector<8x32xf32>
    %c0_39 = arith.constant 0 : index
    %c0_40 = arith.constant 0 : index
    %56 = vector.load %arg13[%c0_39, %c0_40] : memref<1x32xf32, #tpu.memory_space<vmem>>, vector<1x32xf32>
    %c0_41 = arith.constant 0 : index
    %c0_42 = arith.constant 0 : index
    %57 = vector.load %arg14[%c0_41, %c0_42] : memref<1x32xf32, #tpu.memory_space<vmem>>, vector<1x32xf32>
    %cst_43 = arith.constant dense<0.000000e+00> : vector<8xf32>
    %58 = vector.multi_reduction <add>, %55, %cst_43 [1] : vector<8x32xf32> to vector<8xf32>
    %59 = vector.shape_cast %58 : vector<8xf32> to vector<8x1xf32>
    %cst_44 = arith.constant 3.200000e+01 : f32
    %60 = vector.broadcast %cst_44 : f32 to vector<8x1xf32>
    %61 = arith.divf %59, %60 : vector<8x1xf32>
    %62 = vector.broadcast %61 : vector<8x1xf32> to vector<8x32xf32>
    %63 = arith.subf %55, %62 : vector<8x32xf32>
    %64 = arith.mulf %63, %63 : vector<8x32xf32>
    %cst_45 = arith.constant dense<0.000000e+00> : vector<8xf32>
    %65 = vector.multi_reduction <add>, %64, %cst_45 [1] : vector<8x32xf32> to vector<8xf32>
    %66 = vector.shape_cast %65 : vector<8xf32> to vector<8x1xf32>
    %cst_46 = arith.constant 3.200000e+01 : f32
    %67 = vector.broadcast %cst_46 : f32 to vector<8x1xf32>
    %68 = arith.divf %66, %67 : vector<8x1xf32>
    %cst_47 = arith.constant 9.99999974E-6 : f32
    %69 = vector.broadcast %cst_47 : f32 to vector<8x1xf32>
    %70 = arith.addf %68, %69 : vector<8x1xf32>
    %71 = math.rsqrt %70 : vector<8x1xf32>
    %72 = vector.broadcast %71 : vector<8x1xf32> to vector<8x32xf32>
    %73 = arith.mulf %63, %72 : vector<8x32xf32>
    %74 = vector.broadcast %56 : vector<1x32xf32> to vector<8x32xf32>
    %75 = arith.mulf %73, %74 : vector<8x32xf32>
    %76 = vector.broadcast %57 : vector<1x32xf32> to vector<8x32xf32>
    %77 = arith.addf %75, %76 : vector<8x32xf32>
    %c0_48 = arith.constant 0 : index
    %c0_49 = arith.constant 0 : index
    %c0_50 = arith.constant 0 : index
    %78 = vector.load %arg15[%c0_48, %c0_49, %c0_50] : memref<1x8x32xf32, #tpu.memory_space<vmem>>, vector<1x8x32xf32>
    %79 = vector.shape_cast %78 : vector<1x8x32xf32> to vector<8x32xf32>
    %80 = vector.shape_cast %77 : vector<8x32xf32> to vector<1x8x32xf32>
    tpu.vector_store %arg15[%c0_48, %c0_49, %c0_50], %80 {strides = array<i32>} : memref<1x8x32xf32, #tpu.memory_space<vmem>>, vector<1x8x32xf32>,
    return
  }
  func.func @transform_0(%arg0: i32) -> (i32, i32, i32) {
    %c0_i32 = arith.constant 0 : i32
    %c0_i32_0 = arith.constant 0 : i32
    %c0_i32_1 = arith.constant 0 : i32
    return %arg0, %c0_i32, %c0_i32_0 : i32, i32, i32
  }
  func.func @transform_1(%arg0: i32) -> (i32, i32, i32) {
    %c0_i32 = arith.constant 0 : i32
    %c0_i32_0 = arith.constant 0 : i32
    %c0_i32_1 = arith.constant 0 : i32
    return %arg0, %c0_i32, %c0_i32_0 : i32, i32, i32
  }
  func.func @transform_2(%arg0: i32) -> (i32, i32, i32) {
    %c0_i32 = arith.constant 0 : i32
    %c0_i32_0 = arith.constant 0 : i32
    %c0_i32_1 = arith.constant 0 : i32
    return %arg0, %c0_i32, %c0_i32_0 : i32, i32, i32
  }
  func.func @transform_3(%arg0: i32) -> (i32, i32) {
    %c0_i32 = arith.constant 0 : i32
    %c0_i32_0 = arith.constant 0 : i32
    %c0_i32_1 = arith.constant 0 : i32
    return %c0_i32, %c0_i32_0 : i32, i32
  }
  func.func @transform_4(%arg0: i32) -> (i32, i32) {
    %c0_i32 = arith.constant 0 : i32
    %c0_i32_0 = arith.constant 0 : i32
    %c0_i32_1 = arith.constant 0 : i32
    return %c0_i32, %c0_i32_0 : i32, i32
  }
  func.func @transform_5(%arg0: i32) -> (i32, i32) {
    %c0_i32 = arith.constant 0 : i32
    %c0_i32_0 = arith.constant 0 : i32
    %c0_i32_1 = arith.constant 0 : i32
    return %c0_i32, %c0_i32_0 : i32, i32
  }
  func.func @transform_6(%arg0: i32) -> (i32, i32) {
    %c0_i32 = arith.constant 0 : i32
    %c0_i32_0 = arith.constant 0 : i32
    %c0_i32_1 = arith.constant 0 : i32
    return %c0_i32, %c0_i32_0 : i32, i32
  }
  func.func @transform_7(%arg0: i32) -> (i32, i32) {
    %c0_i32 = arith.constant 0 : i32
    %c0_i32_0 = arith.constant 0 : i32
    %c0_i32_1 = arith.constant 0 : i32
    return %c0_i32, %c0_i32_0 : i32, i32
  }
  func.func @transform_8(%arg0: i32) -> (i32, i32) {
    %c0_i32 = arith.constant 0 : i32
    %c0_i32_0 = arith.constant 0 : i32
    %c0_i32_1 = arith.constant 0 : i32
    return %c0_i32, %c0_i32_0 : i32, i32
  }
  func.func @transform_9(%arg0: i32) -> (i32, i32) {
    %c0_i32 = arith.constant 0 : i32
    %c0_i32_0 = arith.constant 0 : i32
    %c0_i32_1 = arith.constant 0 : i32
    return %c0_i32, %c0_i32_0 : i32, i32
  }
  func.func @transform_10(%arg0: i32) -> (i32, i32) {
    %c0_i32 = arith.constant 0 : i32
    %c0_i32_0 = arith.constant 0 : i32
    %c0_i32_1 = arith.constant 0 : i32
    return %c0_i32, %c0_i32_0 : i32, i32
  }
  func.func @transform_11(%arg0: i32) -> (i32, i32) {
    %c0_i32 = arith.constant 0 : i32
    %c0_i32_0 = arith.constant 0 : i32
    %c0_i32_1 = arith.constant 0 : i32
    return %c0_i32, %c0_i32_0 : i32, i32
  }
  func.func @transform_12(%arg0: i32) -> (i32, i32) {
    %c0_i32 = arith.constant 0 : i32
    %c0_i32_0 = arith.constant 0 : i32
    %c0_i32_1 = arith.constant 0 : i32
    return %c0_i32, %c0_i32_0 : i32, i32
  }
  func.func @transform_13(%arg0: i32) -> (i32, i32) {
    %c0_i32 = arith.constant 0 : i32
    %c0_i32_0 = arith.constant 0 : i32
    %c0_i32_1 = arith.constant 0 : i32
    return %c0_i32, %c0_i32_0 : i32, i32
  }
  func.func @transform_14(%arg0: i32) -> (i32, i32, i32) {
    %c0_i32 = arith.constant 0 : i32
    %c0_i32_0 = arith.constant 0 : i32
    %c0_i32_1 = arith.constant 0 : i32
    return %arg0, %c0_i32, %c0_i32_0 : i32, i32, i32
  }
}

module attributes {stable_mosaic.version = 11 : i64} {
  func.func @_causal_attn_kernel(%arg0: i32, %arg1: memref<1x8x32xf32, #tpu.memory_space<vmem>>, %arg2: memref<32x64xbf16, #tpu.memory_space<vmem>>, %arg3: memref<1x64xf32, #tpu.memory_space<vmem>>, %arg4: memref<32x32xbf16, #tpu.memory_space<vmem>>, %arg5: memref<1x32xf32, #tpu.memory_space<vmem>>, %arg6: memref<64x32xbf16, #tpu.memory_space<vmem>>, %arg7: memref<8x1xf32, #tpu.memory_space<vmem>>, %arg8: memref<8x8xf32, #tpu.memory_space<vmem>>, %arg9: memref<32x32xbf16, #tpu.memory_space<vmem>>, %arg10: memref<1x32xf32, #tpu.memory_space<vmem>>, %arg11: memref<1x32xf32, #tpu.memory_space<vmem>>, %arg12: memref<1x32xf32, #tpu.memory_space<vmem>>, %arg13: memref<1x8x32xf32, #tpu.memory_space<vmem>>) attributes {dimension_semantics = [#tpu.dimension_semantics<parallel>], iteration_bounds = array<i64: 2>, scalar_prefetch = 0 : i64, scratch_operands = 0 : i64, tpu.core_type = #tpu.core_type<tc>, window_params = [{transform_indices = @transform_0, window_bounds = array<i64: 1, 8, 32>}, {pipeline_mode = #tpu.pipeline_mode<synchronous>, transform_indices = @transform_1, window_bounds = array<i64: 32, 64>}, {pipeline_mode = #tpu.pipeline_mode<synchronous>, transform_indices = @transform_2, window_bounds = array<i64: 1, 64>}, {pipeline_mode = #tpu.pipeline_mode<synchronous>, transform_indices = @transform_3, window_bounds = array<i64: 32, 32>}, {pipeline_mode = #tpu.pipeline_mode<synchronous>, transform_indices = @transform_4, window_bounds = array<i64: 1, 32>}, {pipeline_mode = #tpu.pipeline_mode<synchronous>, transform_indices = @transform_5, window_bounds = array<i64: 64, 32>}, {pipeline_mode = #tpu.pipeline_mode<synchronous>, transform_indices = @transform_6, window_bounds = array<i64: 8, 1>}, {pipeline_mode = #tpu.pipeline_mode<synchronous>, transform_indices = @transform_7, window_bounds = array<i64: 8, 8>}, {pipeline_mode = #tpu.pipeline_mode<synchronous>, transform_indices = @transform_8, window_bounds = array<i64: 32, 32>}, {pipeline_mode = #tpu.pipeline_mode<synchronous>, transform_indices = @transform_9, window_bounds = array<i64: 1, 32>}, {pipeline_mode = #tpu.pipeline_mode<synchronous>, transform_indices = @transform_10, window_bounds = array<i64: 1, 32>}, {pipeline_mode = #tpu.pipeline_mode<synchronous>, transform_indices = @transform_11, window_bounds = array<i64: 1, 32>}, {transform_indices = @transform_12, window_bounds = array<i64: 1, 8, 32>}]} {
    %c0 = arith.constant 0 : index
    %c0_0 = arith.constant 0 : index
    %c0_1 = arith.constant 0 : index
    %0 = vector.load %arg1[%c0, %c0_0, %c0_1] : memref<1x8x32xf32, #tpu.memory_space<vmem>>, vector<1x8x32xf32>
    %1 = vector.shape_cast %0 : vector<1x8x32xf32> to vector<8x32xf32>
    %2 = arith.truncf %1 : vector<8x32xf32> to vector<8x32xbf16>
    %c0_2 = arith.constant 0 : index
    %c0_3 = arith.constant 0 : index
    %3 = vector.load %arg2[%c0_2, %c0_3] : memref<32x64xbf16, #tpu.memory_space<vmem>>, vector<32x64xbf16>
    %cst = arith.constant dense<0.000000e+00> : vector<8x64xf32>
    %4 = tpu.matmul %2, %3, %cst {dimension_numbers = #tpu.dot_dimension_numbers<[1], [0], [0], [1], [0, 0, 1, 1], [], []>} : vector<8x32xbf16>, vector<32x64xbf16>, vector<8x64xf32> -> vector<8x64xf32>
    %c0_4 = arith.constant 0 : index
    %c0_5 = arith.constant 0 : index
    %5 = vector.load %arg3[%c0_4, %c0_5] : memref<1x64xf32, #tpu.memory_space<vmem>>, vector<1x64xf32>
    %6 = vector.broadcast %5 : vector<1x64xf32> to vector<8x64xf32>
    %7 = arith.addf %4, %6 : vector<8x64xf32>
    %cst_6 = arith.constant 0.000000e+00 : f32
    %8 = vector.broadcast %cst_6 : f32 to vector<8x64xf32>
    %9 = arith.maximumf %7, %8 : vector<8x64xf32>
    %cst_7 = arith.constant 1.000000e-03 : f32
    %10 = vector.broadcast %cst_7 : f32 to vector<8x64xf32>
    %11 = arith.addf %9, %10 : vector<8x64xf32>
    %c0_8 = arith.constant 0 : index
    %c0_9 = arith.constant 0 : index
    %12 = vector.load %arg4[%c0_8, %c0_9] : memref<32x32xbf16, #tpu.memory_space<vmem>>, vector<32x32xbf16>
    %cst_10 = arith.constant dense<0.000000e+00> : vector<8x32xf32>
    %13 = tpu.matmul %2, %12, %cst_10 {dimension_numbers = #tpu.dot_dimension_numbers<[1], [0], [0], [1], [0, 0, 1, 1], [], []>} : vector<8x32xbf16>, vector<32x32xbf16>, vector<8x32xf32> -> vector<8x32xf32>
    %c0_11 = arith.constant 0 : index
    %c0_12 = arith.constant 0 : index
    %14 = vector.load %arg5[%c0_11, %c0_12] : memref<1x32xf32, #tpu.memory_space<vmem>>, vector<1x32xf32>
    %15 = vector.broadcast %14 : vector<1x32xf32> to vector<8x32xf32>
    %16 = arith.addf %13, %15 : vector<8x32xf32>
    %c0_13 = arith.constant 0 : index
    %c0_14 = arith.constant 0 : index
    %17 = vector.load %arg7[%c0_13, %c0_14] : memref<8x1xf32, #tpu.memory_space<vmem>>, vector<8x1xf32>
    %18 = vector.broadcast %17 : vector<8x1xf32> to vector<8x64xf32>
    %19 = arith.mulf %11, %18 : vector<8x64xf32>
    %cst_15 = arith.constant dense<0.000000e+00> : vector<64xf32>
    %20 = vector.multi_reduction <add>, %19, %cst_15 [0] : vector<8x64xf32> to vector<64xf32>
    %21 = vector.shape_cast %20 : vector<64xf32> to vector<1x64xf32>
    %22 = tpu.reciprocal %21 {approx = true} : vector<1x64xf32> -> vector<1x64xf32>
    %23 = vector.broadcast %22 : vector<1x64xf32> to vector<8x64xf32>
    %24 = arith.mulf %11, %23 : vector<8x64xf32>
    %25 = arith.truncf %24 : vector<8x64xf32> to vector<8x64xbf16>
    %c0_16 = arith.constant 0 : index
    %c0_17 = arith.constant 0 : index
    %26 = vector.load %arg6[%c0_16, %c0_17] : memref<64x32xbf16, #tpu.memory_space<vmem>>, vector<64x32xbf16>
    %cst_18 = arith.constant dense<0.000000e+00> : vector<8x32xf32>
    %27 = tpu.matmul %25, %26, %cst_18 {dimension_numbers = #tpu.dot_dimension_numbers<[1], [0], [0], [1], [0, 0, 1, 1], [], []>} : vector<8x64xbf16>, vector<64x32xbf16>, vector<8x32xf32> -> vector<8x32xf32>
    %28 = arith.mulf %27, %16 : vector<8x32xf32>
    %c0_19 = arith.constant 0 : index
    %c0_20 = arith.constant 0 : index
    %29 = vector.load %arg8[%c0_19, %c0_20] : memref<8x8xf32, #tpu.memory_space<vmem>>, vector<8x8xf32>
    %c0_21 = arith.constant 0 : index
    %c0_22 = arith.constant 0 : index
    %30 = vector.load %arg9[%c0_21, %c0_22] : memref<32x32xbf16, #tpu.memory_space<vmem>>, vector<32x32xbf16>
    %c0_23 = arith.constant 0 : index
    %c0_24 = arith.constant 0 : index
    %31 = vector.load %arg10[%c0_23, %c0_24] : memref<1x32xf32, #tpu.memory_space<vmem>>, vector<1x32xf32>
    %c0_25 = arith.constant 0 : index
    %c0_26 = arith.constant 0 : index
    %32 = vector.load %arg11[%c0_25, %c0_26] : memref<1x32xf32, #tpu.memory_space<vmem>>, vector<1x32xf32>
    %c0_27 = arith.constant 0 : index
    %c0_28 = arith.constant 0 : index
    %33 = vector.load %arg12[%c0_27, %c0_28] : memref<1x32xf32, #tpu.memory_space<vmem>>, vector<1x32xf32>
    %cst_29 = arith.constant 0.000000e+00 : f32
    %34 = vector.broadcast %cst_29 : f32 to vector<1x32xf32>
    %cst_30 = arith.constant dense<0.000000e+00> : vector<8x32xf32>
    %35 = tpu.matmul %29, %28, %cst_30 {dimension_numbers = #tpu.dot_dimension_numbers<[1], [0], [0], [1], [0, 0, 1, 1], [], []>} : vector<8x8xf32>, vector<8x32xf32>, vector<8x32xf32> -> vector<8x32xf32>
    %36 = vector.broadcast %34 : vector<1x32xf32> to vector<8x32xf32>
    %37 = arith.addf %35, %36 : vector<8x32xf32>
    %38 = arith.truncf %37 : vector<8x32xf32> to vector<8x32xbf16>
    %cst_31 = arith.constant dense<0.000000e+00> : vector<8x32xf32>
    %39 = tpu.matmul %38, %30, %cst_31 {dimension_numbers = #tpu.dot_dimension_numbers<[1], [0], [0], [1], [0, 0, 1, 1], [], []>} : vector<8x32xbf16>, vector<32x32xbf16>, vector<8x32xf32> -> vector<8x32xf32>
    %40 = vector.broadcast %31 : vector<1x32xf32> to vector<8x32xf32>
    %41 = arith.addf %39, %40 : vector<8x32xf32>
    %42 = arith.addf %41, %1 : vector<8x32xf32>
    %cst_32 = arith.constant dense<0.000000e+00> : vector<8xf32>
    %43 = vector.multi_reduction <add>, %42, %cst_32 [1] : vector<8x32xf32> to vector<8xf32>
    %44 = vector.shape_cast %43 : vector<8xf32> to vector<8x1xf32>
    %cst_33 = arith.constant 3.200000e+01 : f32
    %45 = vector.broadcast %cst_33 : f32 to vector<8x1xf32>
    %46 = arith.divf %44, %45 : vector<8x1xf32>
    %47 = vector.broadcast %46 : vector<8x1xf32> to vector<8x32xf32>
    %48 = arith.subf %42, %47 : vector<8x32xf32>
    %49 = arith.mulf %48, %48 : vector<8x32xf32>
    %cst_34 = arith.constant dense<0.000000e+00> : vector<8xf32>
    %50 = vector.multi_reduction <add>, %49, %cst_34 [1] : vector<8x32xf32> to vector<8xf32>
    %51 = vector.shape_cast %50 : vector<8xf32> to vector<8x1xf32>
    %cst_35 = arith.constant 3.200000e+01 : f32
    %52 = vector.broadcast %cst_35 : f32 to vector<8x1xf32>
    %53 = arith.divf %51, %52 : vector<8x1xf32>
    %cst_36 = arith.constant 9.99999974E-6 : f32
    %54 = vector.broadcast %cst_36 : f32 to vector<8x1xf32>
    %55 = arith.addf %53, %54 : vector<8x1xf32>
    %56 = math.rsqrt %55 : vector<8x1xf32>
    %57 = vector.broadcast %56 : vector<8x1xf32> to vector<8x32xf32>
    %58 = arith.mulf %48, %57 : vector<8x32xf32>
    %59 = vector.broadcast %32 : vector<1x32xf32> to vector<8x32xf32>
    %60 = arith.mulf %58, %59 : vector<8x32xf32>
    %61 = vector.broadcast %33 : vector<1x32xf32> to vector<8x32xf32>
    %62 = arith.addf %60, %61 : vector<8x32xf32>
    %c0_37 = arith.constant 0 : index
    %c0_38 = arith.constant 0 : index
    %c0_39 = arith.constant 0 : index
    %63 = vector.load %arg13[%c0_37, %c0_38, %c0_39] : memref<1x8x32xf32, #tpu.memory_space<vmem>>, vector<1x8x32xf32>
    %64 = vector.shape_cast %63 : vector<1x8x32xf32> to vector<8x32xf32>
    %65 = vector.shape_cast %62 : vector<8x32xf32> to vector<1x8x32xf32>
    tpu.vector_store %arg13[%c0_37, %c0_38, %c0_39], %65 {strides = array<i32>} : memref<1x8x32xf32, #tpu.memory_space<vmem>>, vector<1x8x32xf32>,
    return
  }
  func.func @transform_0(%arg0: i32) -> (i32, i32, i32) {
    %c0_i32 = arith.constant 0 : i32
    %c0_i32_0 = arith.constant 0 : i32
    %c0_i32_1 = arith.constant 0 : i32
    return %arg0, %c0_i32, %c0_i32_0 : i32, i32, i32
  }
  func.func @transform_1(%arg0: i32) -> (i32, i32) {
    %c0_i32 = arith.constant 0 : i32
    %c0_i32_0 = arith.constant 0 : i32
    %c0_i32_1 = arith.constant 0 : i32
    return %c0_i32, %c0_i32_0 : i32, i32
  }
  func.func @transform_2(%arg0: i32) -> (i32, i32) {
    %c0_i32 = arith.constant 0 : i32
    %c0_i32_0 = arith.constant 0 : i32
    %c0_i32_1 = arith.constant 0 : i32
    return %c0_i32, %c0_i32_0 : i32, i32
  }
  func.func @transform_3(%arg0: i32) -> (i32, i32) {
    %c0_i32 = arith.constant 0 : i32
    %c0_i32_0 = arith.constant 0 : i32
    %c0_i32_1 = arith.constant 0 : i32
    return %c0_i32, %c0_i32_0 : i32, i32
  }
  func.func @transform_4(%arg0: i32) -> (i32, i32) {
    %c0_i32 = arith.constant 0 : i32
    %c0_i32_0 = arith.constant 0 : i32
    %c0_i32_1 = arith.constant 0 : i32
    return %c0_i32, %c0_i32_0 : i32, i32
  }
  func.func @transform_5(%arg0: i32) -> (i32, i32) {
    %c0_i32 = arith.constant 0 : i32
    %c0_i32_0 = arith.constant 0 : i32
    %c0_i32_1 = arith.constant 0 : i32
    return %c0_i32, %c0_i32_0 : i32, i32
  }
  func.func @transform_6(%arg0: i32) -> (i32, i32) {
    %c0_i32 = arith.constant 0 : i32
    %c0_i32_0 = arith.constant 0 : i32
    %c0_i32_1 = arith.constant 0 : i32
    return %c0_i32, %c0_i32_0 : i32, i32
  }
  func.func @transform_7(%arg0: i32) -> (i32, i32) {
    %c0_i32 = arith.constant 0 : i32
    %c0_i32_0 = arith.constant 0 : i32
    %c0_i32_1 = arith.constant 0 : i32
    return %c0_i32, %c0_i32_0 : i32, i32
  }
  func.func @transform_8(%arg0: i32) -> (i32, i32) {
    %c0_i32 = arith.constant 0 : i32
    %c0_i32_0 = arith.constant 0 : i32
    %c0_i32_1 = arith.constant 0 : i32
    return %c0_i32, %c0_i32_0 : i32, i32
  }
  func.func @transform_9(%arg0: i32) -> (i32, i32) {
    %c0_i32 = arith.constant 0 : i32
    %c0_i32_0 = arith.constant 0 : i32
    %c0_i32_1 = arith.constant 0 : i32
    return %c0_i32, %c0_i32_0 : i32, i32
  }
  func.func @transform_10(%arg0: i32) -> (i32, i32) {
    %c0_i32 = arith.constant 0 : i32
    %c0_i32_0 = arith.constant 0 : i32
    %c0_i32_1 = arith.constant 0 : i32
    return %c0_i32, %c0_i32_0 : i32, i32
  }
  func.func @transform_11(%arg0: i32) -> (i32, i32) {
    %c0_i32 = arith.constant 0 : i32
    %c0_i32_0 = arith.constant 0 : i32
    %c0_i32_1 = arith.constant 0 : i32
    return %c0_i32, %c0_i32_0 : i32, i32
  }
  func.func @transform_12(%arg0: i32) -> (i32, i32, i32) {
    %c0_i32 = arith.constant 0 : i32
    %c0_i32_0 = arith.constant 0 : i32
    %c0_i32_1 = arith.constant 0 : i32
    return %arg0, %c0_i32, %c0_i32_0 : i32, i32, i32
  }
}

module attributes {stable_mosaic.version = 11 : i64} {
  func.func @_ffn_add_ln_kernel(%arg0: i32, %arg1: i32, %arg2: memref<16x32xf32, #tpu.memory_space<vmem>>, %arg3: memref<32x64xbf16, #tpu.memory_space<vmem>>, %arg4: memref<1x64xf32, #tpu.memory_space<vmem>>, %arg5: memref<64x32xbf16, #tpu.memory_space<vmem>>, %arg6: memref<1x32xf32, #tpu.memory_space<vmem>>, %arg7: memref<1x32xf32, #tpu.memory_space<vmem>>, %arg8: memref<1x32xf32, #tpu.memory_space<vmem>>, %arg9: memref<16x32xf32, #tpu.memory_space<vmem>>, %arg10: memref<16x32xf32, #tpu.memory_space<vmem>>) attributes {dimension_semantics = [#tpu.dimension_semantics<parallel>, #tpu.dimension_semantics<arbitrary>], iteration_bounds = array<i64: 1, 1>, scalar_prefetch = 0 : i64, scratch_operands = 1 : i64, tpu.core_type = #tpu.core_type<tc>, window_params = [{transform_indices = @transform_0, window_bounds = array<i64: 16, 32>}, {transform_indices = @transform_1, window_bounds = array<i64: 32, 64>}, {transform_indices = @transform_2, window_bounds = array<i64: 1, 64>}, {transform_indices = @transform_3, window_bounds = array<i64: 64, 32>}, {pipeline_mode = #tpu.pipeline_mode<synchronous>, transform_indices = @transform_4, window_bounds = array<i64: 1, 32>}, {pipeline_mode = #tpu.pipeline_mode<synchronous>, transform_indices = @transform_5, window_bounds = array<i64: 1, 32>}, {pipeline_mode = #tpu.pipeline_mode<synchronous>, transform_indices = @transform_6, window_bounds = array<i64: 1, 32>}, {transform_indices = @transform_7, window_bounds = array<i64: 16, 32>}]} {
    %c0_i32 = arith.constant 0 : i32
    %0 = arith.cmpi eq, %arg1, %c0_i32 : i32
    %1 = arith.extui %0 : i1 to i32
    %c0_i32_0 = arith.constant 0 : i32
    %2 = arith.cmpi ne, %1, %c0_i32_0 : i32
    scf.if %2 {
      %cst_19 = arith.constant 0.000000e+00 : f32
      %32 = vector.broadcast %cst_19 : f32 to vector<16x32xf32>
      %c0_20 = arith.constant 0 : index
      %c0_21 = arith.constant 0 : index
      %33 = vector.load %arg10[%c0_20, %c0_21] : memref<16x32xf32, #tpu.memory_space<vmem>>, vector<16x32xf32>
      tpu.vector_store %arg10[%c0_20, %c0_21], %32 {strides = array<i32>} : memref<16x32xf32, #tpu.memory_space<vmem>>, vector<16x32xf32>,
    } else {
    }
    %c0 = arith.constant 0 : index
    %c0_1 = arith.constant 0 : index
    %3 = vector.load %arg2[%c0, %c0_1] : memref<16x32xf32, #tpu.memory_space<vmem>>, vector<16x32xf32>
    %4 = arith.truncf %3 : vector<16x32xf32> to vector<16x32xbf16>
    %c0_2 = arith.constant 0 : index
    %c0_3 = arith.constant 0 : index
    %5 = vector.load %arg3[%c0_2, %c0_3] : memref<32x64xbf16, #tpu.memory_space<vmem>>, vector<32x64xbf16>
    %cst = arith.constant dense<0.000000e+00> : vector<16x64xf32>
    %6 = tpu.matmul %4, %5, %cst {dimension_numbers = #tpu.dot_dimension_numbers<[1], [0], [0], [1], [0, 0, 1, 1], [], []>} : vector<16x32xbf16>, vector<32x64xbf16>, vector<16x64xf32> -> vector<16x64xf32>
    %c0_4 = arith.constant 0 : index
    %c0_5 = arith.constant 0 : index
    %7 = vector.load %arg4[%c0_4, %c0_5] : memref<1x64xf32, #tpu.memory_space<vmem>>, vector<1x64xf32>
    %8 = vector.broadcast %7 : vector<1x64xf32> to vector<16x64xf32>
    %9 = arith.addf %6, %8 : vector<16x64xf32>
    %10 = arith.mulf %9, %9 : vector<16x64xf32>
    %11 = arith.mulf %9, %10 : vector<16x64xf32>
    %cst_6 = arith.constant 4.471500e-02 : f32
    %12 = vector.broadcast %cst_6 : f32 to vector<16x64xf32>
    %13 = arith.mulf %12, %11 : vector<16x64xf32>
    %14 = arith.addf %9, %13 : vector<16x64xf32>
    %cst_7 = arith.constant 0.797884583 : f32
    %15 = vector.broadcast %cst_7 : f32 to vector<16x64xf32>
    %16 = arith.mulf %15, %14 : vector<16x64xf32>
    %17 = math.tanh %16 : vector<16x64xf32>
    %cst_8 = arith.constant 1.000000e+00 : f32
    %18 = vector.broadcast %cst_8 : f32 to vector<16x64xf32>
    %19 = arith.addf %18, %17 : vector<16x64xf32>
    %cst_9 = arith.constant 5.000000e-01 : f32
    %20 = vector.broadcast %cst_9 : f32 to vector<16x64xf32>
    %21 = arith.mulf %20, %19 : vector<16x64xf32>
    %22 = arith.mulf %9, %21 : vector<16x64xf32>
    %c0_10 = arith.constant 0 : index
    %c0_11 = arith.constant 0 : index
    %23 = vector.load %arg10[%c0_10, %c0_11] : memref<16x32xf32, #tpu.memory_space<vmem>>, vector<16x32xf32>
    %24 = arith.truncf %22 : vector<16x64xf32> to vector<16x64xbf16>
    %c0_12 = arith.constant 0 : index
    %c0_13 = arith.constant 0 : index
    %25 = vector.load %arg5[%c0_12, %c0_13] : memref<64x32xbf16, #tpu.memory_space<vmem>>, vector<64x32xbf16>
    %cst_14 = arith.constant dense<0.000000e+00> : vector<16x32xf32>
    %26 = tpu.matmul %24, %25, %cst_14 {dimension_numbers = #tpu.dot_dimension_numbers<[1], [0], [0], [1], [0, 0, 1, 1], [], []>} : vector<16x64xbf16>, vector<64x32xbf16>, vector<16x32xf32> -> vector<16x32xf32>
    %27 = arith.addf %23, %26 : vector<16x32xf32>
    %c0_15 = arith.constant 0 : index
    %c0_16 = arith.constant 0 : index
    %28 = vector.load %arg10[%c0_15, %c0_16] : memref<16x32xf32, #tpu.memory_space<vmem>>, vector<16x32xf32>
    tpu.vector_store %arg10[%c0_15, %c0_16], %27 {strides = array<i32>} : memref<16x32xf32, #tpu.memory_space<vmem>>, vector<16x32xf32>,
    %c0_i32_17 = arith.constant 0 : i32
    %29 = arith.cmpi eq, %arg1, %c0_i32_17 : i32
    %30 = arith.extui %29 : i1 to i32
    %c0_i32_18 = arith.constant 0 : i32
    %31 = arith.cmpi ne, %30, %c0_i32_18 : i32
    scf.if %31 {
      %c0_19 = arith.constant 0 : index
      %c0_20 = arith.constant 0 : index
      %32 = vector.load %arg10[%c0_19, %c0_20] : memref<16x32xf32, #tpu.memory_space<vmem>>, vector<16x32xf32>
      %c0_21 = arith.constant 0 : index
      %c0_22 = arith.constant 0 : index
      %33 = vector.load %arg6[%c0_21, %c0_22] : memref<1x32xf32, #tpu.memory_space<vmem>>, vector<1x32xf32>
      %34 = vector.broadcast %33 : vector<1x32xf32> to vector<16x32xf32>
      %35 = arith.addf %32, %34 : vector<16x32xf32>
      %36 = arith.addf %35, %3 : vector<16x32xf32>
      %c0_23 = arith.constant 0 : index
      %c0_24 = arith.constant 0 : index
      %37 = vector.load %arg7[%c0_23, %c0_24] : memref<1x32xf32, #tpu.memory_space<vmem>>, vector<1x32xf32>
      %c0_25 = arith.constant 0 : index
      %c0_26 = arith.constant 0 : index
      %38 = vector.load %arg8[%c0_25, %c0_26] : memref<1x32xf32, #tpu.memory_space<vmem>>, vector<1x32xf32>
      %cst_27 = arith.constant dense<0.000000e+00> : vector<16xf32>
      %39 = vector.multi_reduction <add>, %36, %cst_27 [1] : vector<16x32xf32> to vector<16xf32>
      %40 = vector.shape_cast %39 : vector<16xf32> to vector<16x1xf32>
      %cst_28 = arith.constant 3.200000e+01 : f32
      %41 = vector.broadcast %cst_28 : f32 to vector<16x1xf32>
      %42 = arith.divf %40, %41 : vector<16x1xf32>
      %43 = vector.broadcast %42 : vector<16x1xf32> to vector<16x32xf32>
      %44 = arith.subf %36, %43 : vector<16x32xf32>
      %45 = arith.mulf %44, %44 : vector<16x32xf32>
      %cst_29 = arith.constant dense<0.000000e+00> : vector<16xf32>
      %46 = vector.multi_reduction <add>, %45, %cst_29 [1] : vector<16x32xf32> to vector<16xf32>
      %47 = vector.shape_cast %46 : vector<16xf32> to vector<16x1xf32>
      %cst_30 = arith.constant 3.200000e+01 : f32
      %48 = vector.broadcast %cst_30 : f32 to vector<16x1xf32>
      %49 = arith.divf %47, %48 : vector<16x1xf32>
      %cst_31 = arith.constant 9.99999974E-6 : f32
      %50 = vector.broadcast %cst_31 : f32 to vector<16x1xf32>
      %51 = arith.addf %49, %50 : vector<16x1xf32>
      %52 = math.rsqrt %51 : vector<16x1xf32>
      %53 = vector.broadcast %52 : vector<16x1xf32> to vector<16x32xf32>
      %54 = arith.mulf %44, %53 : vector<16x32xf32>
      %55 = vector.broadcast %37 : vector<1x32xf32> to vector<16x32xf32>
      %56 = arith.mulf %54, %55 : vector<16x32xf32>
      %57 = vector.broadcast %38 : vector<1x32xf32> to vector<16x32xf32>
      %58 = arith.addf %56, %57 : vector<16x32xf32>
      %c0_32 = arith.constant 0 : index
      %c0_33 = arith.constant 0 : index
      %59 = vector.load %arg9[%c0_32, %c0_33] : memref<16x32xf32, #tpu.memory_space<vmem>>, vector<16x32xf32>
      tpu.vector_store %arg9[%c0_32, %c0_33], %58 {strides = array<i32>} : memref<16x32xf32, #tpu.memory_space<vmem>>, vector<16x32xf32>,
    } else {
    }
    return
  }
  func.func @transform_0(%arg0: i32, %arg1: i32) -> (i32, i32) {
    %c0_i32 = arith.constant 0 : i32
    %c0_i32_0 = arith.constant 0 : i32
    return %arg0, %c0_i32 : i32, i32
  }
  func.func @transform_1(%arg0: i32, %arg1: i32) -> (i32, i32) {
    %c0_i32 = arith.constant 0 : i32
    %c0_i32_0 = arith.constant 0 : i32
    return %c0_i32, %arg1 : i32, i32
  }
  func.func @transform_2(%arg0: i32, %arg1: i32) -> (i32, i32) {
    %c0_i32 = arith.constant 0 : i32
    %c0_i32_0 = arith.constant 0 : i32
    return %c0_i32, %arg1 : i32, i32
  }
  func.func @transform_3(%arg0: i32, %arg1: i32) -> (i32, i32) {
    %c0_i32 = arith.constant 0 : i32
    %c0_i32_0 = arith.constant 0 : i32
    return %arg1, %c0_i32 : i32, i32
  }
  func.func @transform_4(%arg0: i32, %arg1: i32) -> (i32, i32) {
    %c0_i32 = arith.constant 0 : i32
    %c0_i32_0 = arith.constant 0 : i32
    %c0_i32_1 = arith.constant 0 : i32
    return %c0_i32, %c0_i32_0 : i32, i32
  }
  func.func @transform_5(%arg0: i32, %arg1: i32) -> (i32, i32) {
    %c0_i32 = arith.constant 0 : i32
    %c0_i32_0 = arith.constant 0 : i32
    %c0_i32_1 = arith.constant 0 : i32
    return %c0_i32, %c0_i32_0 : i32, i32
  }
  func.func @transform_6(%arg0: i32, %arg1: i32) -> (i32, i32) {
    %c0_i32 = arith.constant 0 : i32
    %c0_i32_0 = arith.constant 0 : i32
    %c0_i32_1 = arith.constant 0 : i32
    return %c0_i32, %c0_i32_0 : i32, i32
  }
  func.func @transform_7(%arg0: i32, %arg1: i32) -> (i32, i32) {
    %c0_i32 = arith.constant 0 : i32
    %c0_i32_0 = arith.constant 0 : i32
    return %arg0, %c0_i32 : i32, i32
  }
}

</mosaic_0001>

<llo_original>
// kernel: decoder_block_forward.3
$region0: #{decoder_block_forward.3}
  #allocation0 [shape = 'u32[]', space=smem, size = 0x4, offset = 0x4, fixed_abs, tag = 'smem constant byte address 0x4 - core index']
  #allocation1 [shape = 'u32[72,128]{1,0:T(1,128)}', space=vmem, size = 0x9000, scoped, tag = 'internal scratch']
  %s0 = inlined_call_operand.vmem [shape: f32[2,8,32], index: 0, kind: input, shape index: {}]
  %s1 = inlined_call_operand.vmem [shape: bf16[32,64], index: 1, kind: input, shape index: {}]
  %s2 = inlined_call_operand.hbm [shape: f32[1,64], index: 2, kind: input, shape index: {}]
  %s3 = inlined_call_operand.hbm [shape: bf16[32,32], index: 3, kind: input, shape index: {}]
  %s4 = inlined_call_operand.hbm [shape: f32[1,32], index: 4, kind: input, shape index: {}]
  %s5 = inlined_call_operand.vmem [shape: bf16[64,32], index: 5, kind: input, shape index: {}]
  %s6 = inlined_call_operand.vmem [shape: f32[8,1], index: 6, kind: input, shape index: {}]
  %s7 = inlined_call_operand.vmem [shape: f32[8,8], index: 7, kind: input, shape index: {}]
  %s8 = inlined_call_operand.hbm [shape: bf16[32,32], index: 8, kind: input, shape index: {}]
  %s9 = inlined_call_operand.hbm [shape: f32[1,32], index: 9, kind: input, shape index: {}]
  %s10 = inlined_call_operand.hbm [shape: f32[1,32], index: 10, kind: input, shape index: {}]
  %s11 = inlined_call_operand.hbm [shape: f32[1,32], index: 11, kind: input, shape index: {}]
  %s12 = inlined_call_operand.vmem [shape: f32[2,8,32], index: 12, kind: output, shape index: {}]
  %s13 = sld [smem:[#allocation0]]
  $region109: #{decoder_block_forward.3} parent=0
    _
  %s15 = ssub.s32 1, %s13
  %s16 = scalar_select 0, %s15, %s13
  $region1: #{decoder_block_forward.3} parent=0
    #allocation2 [shape = 'u8[512]{0}', space=vmem, size = 0x400, scoped, tag = 'input window, operand 2, single buffered']
    #allocation3 [shape = 's32[2]{0}', space=sflag, size = 0x8, scoped, tag = 'scoped memory for decoder_block_forward.3']
    #allocation4 [shape = 'u8[8192]{0}', space=vmem, size = 0x2000, scoped, tag = 'input window, operand 3, single buffered']
    #allocation5 [shape = 's32[1]{0}', space=sflag, size = 0x4, scoped, tag = 'scoped memory for decoder_block_forward.3']
    #allocation6 [shape = 'u8[512]{0}', space=vmem, size = 0x400, scoped, tag = 'input window, operand 4, single buffered']
    #allocation7 [shape = 'u8[8192]{0}', space=vmem, size = 0x2000, scoped, tag = 'input window, operand 8, single buffered']
    #allocation8 [shape = 's32[1]{0}', space=sflag, size = 0x4, scoped, tag = 'scoped memory for decoder_block_forward.3']
    #allocation9 [shape = 'u8[512]{0}', space=vmem, size = 0x400, scoped, tag = 'input window, operand 9, single buffered']
    #allocation10 [shape = 'u8[512]{0}', space=vmem, size = 0x400, scoped, tag = 'input window, operand 10, single buffered']
    #allocation11 [shape = 's32[1]{0}', space=sflag, size = 0x4, scoped, tag = 'scoped memory for decoder_block_forward.3']
    #allocation12 [shape = 'u8[512]{0}', space=vmem, size = 0x400, scoped, tag = 'input window, operand 11, single buffered']
    %17 = vsyncpa [#allocation3], 0
    %18 = vsyncpa [#allocation5], 0
    %19 = vsyncpa [#allocation8], 0
    %20 = vsyncpa [#allocation11], 0
    loop: start=0, step=1, limit=4
    $region2: #{decoder_block_forward.3} parent=1 // loop_pre_header
      _
    $region3: #{decoder_block_forward.3} parent=1 // loop_header
      %s22 = sphi 0, %s26
      %p23 = scmp.ge.s32.totalorder %s22, 4
      %s32 = sphi 0, %s34
      %s35 = sphi 0, %s32
      %s36 = sphi 0, %s35
      %s52 = sphi 0, %s36
      %s56 = sphi 0, %s56
      %s58 = sphi 0, %s56
      %s59 = sphi 0, %s58
      %s73 = sphi 0, %s59
      %s77 = sphi 0, %s77
      %s79 = sphi 0, %s77
      %s80 = sphi 0, %s79
      %s94 = sphi 0, %s80
      %s98 = sphi 0, %s98
      %s100 = sphi 0, %s98
      %s101 = sphi 0, %s100
      %s115 = sphi 0, %s101
      %s119 = sphi 0, %s119
      %s121 = sphi 0, %s119
      %s122 = sphi 0, %s121
      %s136 = sphi 0, %s122
      %s140 = sphi 0, %s140
      %s142 = sphi 0, %s140
      %s143 = sphi 0, %s142
      %s157 = sphi 0, %s143
      %s161 = sphi 0, %s161
      %s163 = sphi 0, %s161
      %s164 = sphi 0, %s163
      %s178 = sphi 0, %s164
      %s182 = sphi 0, %s182
      %s184 = sphi 0, %s182
      %s185 = sphi 0, %s184
      %s199 = sphi 0, %s185
      %s203 = sphi 0, %s203
      %s205 = sphi 0, %s203
      %s206 = sphi 0, %s205
      %s220 = sphi 0, %s206
      %s224 = sphi 0, %s224
      %s226 = sphi 0, %s224
      %s227 = sphi 0, %s226
      %s241 = sphi 0, %s227
      %s245 = sphi 0, %s245
      %s247 = sphi 0, %s245
      %s248 = sphi 0, %s247
      %s262 = sphi 0, %s248
      %s266 = sphi 0, %s266
      %s268 = sphi 0, %s266
      %s269 = sphi 0, %s268
      %s283 = sphi 0, %s269
      %s289 = sphi 0, %s291
      %s292 = sphi 0, %s289
      %s293 = sphi 0, %s292
      %s309 = sphi 0, %s293
    $region4: #{decoder_block_forward.3} parent=1 // loop_header_branch
      %25 = sbr.rel (%p23) target = $region8
    $region5: #{decoder_block_forward.3} parent=1 // loop_body
      %s27 = ssub.s32 %s22, 1
      %s28 = ssub.s32 %s22, 2
      %s29 = sadd.s32 %s22, 1
      %s30 = ssub.s32 %s22, %s29
      %p31 = scmp.eq.s32.totalorder %s30, 0
      %s33 = sadd.s32 %s32, 1
      %s34 = scalar_select %p31, %s32, %s33
      %p37 = pneg %p31
      %p38 = scmp.eq.s32.totalorder %s22, 1
      %p39 = por %p37, %p38
      %p40 = scmp.ne.s32.totalorder %s32, %s35
      %p41 = scmp.eq.s32.totalorder %s22, 0
      %p42 = por %p40, %p41
      %p43 = scmp.ne.s32.totalorder %s32, %s35
      %p44 = scmp.eq.s32.totalorder %s27, 1
      %p45 = por %p43, %p44
      %p46 = scmp.ne.s32.totalorder %s35, %s36
      %p47 = scmp.eq.s32.totalorder %s27, 0
      %p48 = por %p46, %p47
      %p49 = scmp.ne.s32.totalorder %s35, %s36
      %p50 = scmp.eq.s32.totalorder %s28, 1
      %p51 = por %p49, %p50
      %p53 = scmp.ne.s32.totalorder %s36, %s52
      %p54 = scmp.eq.s32.totalorder %s28, 0
      %p55 = por %p53, %p54
      %s57 = sadd.s32 %s56, 1
      %p60 = scmp.eq.s32.totalorder %s22, 1
      %p61 = scmp.ne.s32.totalorder %s56, %s58
      %p62 = scmp.eq.s32.totalorder %s22, 0
      %p63 = por %p61, %p62
      %p64 = scmp.ne.s32.totalorder %s56, %s58
      %p65 = scmp.eq.s32.totalorder %s27, 1
      %p66 = por %p64, %p65
      %p67 = scmp.ne.s32.totalorder %s58, %s59
      %p68 = scmp.eq.s32.totalorder %s27, 0
      %p69 = por %p67, %p68
      %p70 = scmp.ne.s32.totalorder %s58, %s59
      %p71 = scmp.eq.s32.totalorder %s28, 1
      %p72 = por %p70, %p71
      %p74 = scmp.ne.s32.totalorder %s59, %s73
      %p75 = scmp.eq.s32.totalorder %s28, 0
      %p76 = por %p74, %p75
      %s78 = sadd.s32 %s77, 1
      %p81 = scmp.eq.s32.totalorder %s22, 1
      %p82 = scmp.ne.s32.totalorder %s77, %s79
      %p83 = scmp.eq.s32.totalorder %s22, 0
      %p84 = por %p82, %p83
      %p85 = scmp.ne.s32.totalorder %s77, %s79
      %p86 = scmp.eq.s32.totalorder %s27, 1
      %p87 = por %p85, %p86
      %p88 = scmp.ne.s32.totalorder %s79, %s80
      %p89 = scmp.eq.s32.totalorder %s27, 0
      %p90 = por %p88, %p89
      %p91 = scmp.ne.s32.totalorder %s79, %s80
      %p92 = scmp.eq.s32.totalorder %s28, 1
      %p93 = por %p91, %p92
      %p95 = scmp.ne.s32.totalorder %s80, %s94
      %p96 = scmp.eq.s32.totalorder %s28, 0
      %p97 = por %p95, %p96
      %s99 = sadd.s32 %s98, 1
      %p102 = scmp.eq.s32.totalorder %s22, 1
      %p103 = scmp.ne.s32.totalorder %s98, %s100
      %p104 = scmp.eq.s32.totalorder %s22, 0
      %p105 = por %p103, %p104
      %p106 = scmp.ne.s32.totalorder %s98, %s100
      %p107 = scmp.eq.s32.totalorder %s27, 1
      %p108 = por %p106, %p107
      %p109 = scmp.ne.s32.totalorder %s100, %s101
      %p110 = scmp.eq.s32.totalorder %s27, 0
      %p111 = por %p109, %p110
      %p112 = scmp.ne.s32.totalorder %s100, %s101
      %p113 = scmp.eq.s32.totalorder %s28, 1
      %p114 = por %p112, %p113
      %p116 = scmp.ne.s32.totalorder %s101, %s115
      %p117 = scmp.eq.s32.totalorder %s28, 0
      %p118 = por %p116, %p117
      %s120 = sadd.s32 %s119, 1
      %p123 = scmp.eq.s32.totalorder %s22, 1
      %p124 = scmp.ne.s32.totalorder %s119, %s121
      %p125 = scmp.eq.s32.totalorder %s22, 0
      %p126 = por %p124, %p125
      %p127 = scmp.ne.s32.totalorder %s119, %s121
      %p128 = scmp.eq.s32.totalorder %s27, 1
      %p129 = por %p127, %p128
      %p130 = scmp.ne.s32.totalorder %s121, %s122
      %p131 = scmp.eq.s32.totalorder %s27, 0
      %p132 = por %p130, %p131
      %p133 = scmp.ne.s32.totalorder %s121, %s122
      %p134 = scmp.eq.s32.totalorder %s28, 1
      %p135 = por %p133, %p134
      %p137 = scmp.ne.s32.totalorder %s122, %s136
      %p138 = scmp.eq.s32.totalorder %s28, 0
      %p139 = por %p137, %p138
      %s141 = sadd.s32 %s140, 1
      %p144 = scmp.eq.s32.totalorder %s22, 1
      %p145 = scmp.ne.s32.totalorder %s140, %s142
      %p146 = scmp.eq.s32.totalorder %s22, 0
      %p147 = por %p145, %p146
      %p148 = scmp.ne.s32.totalorder %s140, %s142
      %p149 = scmp.eq.s32.totalorder %s27, 1
      %p150 = por %p148, %p149
      %p151 = scmp.ne.s32.totalorder %s142, %s143
      %p152 = scmp.eq.s32.totalorder %s27, 0
      %p153 = por %p151, %p152
      %p154 = scmp.ne.s32.totalorder %s142, %s143
      %p155 = scmp.eq.s32.totalorder %s28, 1
      %p156 = por %p154, %p155
      %p158 = scmp.ne.s32.totalorder %s143, %s157
      %p159 = scmp.eq.s32.totalorder %s28, 0
      %p160 = por %p158, %p159
      %s162 = sadd.s32 %s161, 1
      %p165 = scmp.eq.s32.totalorder %s22, 1
      %p166 = scmp.ne.s32.totalorder %s161, %s163
      %p167 = scmp.eq.s32.totalorder %s22, 0
      %p168 = por %p166, %p167
      %p169 = scmp.ne.s32.totalorder %s161, %s163
      %p170 = scmp.eq.s32.totalorder %s27, 1
      %p171 = por %p169, %p170
      %p172 = scmp.ne.s32.totalorder %s163, %s164
      %p173 = scmp.eq.s32.totalorder %s27, 0
      %p174 = por %p172, %p173
      %p175 = scmp.ne.s32.totalorder %s163, %s164
      %p176 = scmp.eq.s32.totalorder %s28, 1
      %p177 = por %p175, %p176
      %p179 = scmp.ne.s32.totalorder %s164, %s178
      %p180 = scmp.eq.s32.totalorder %s28, 0
      %p181 = por %p179, %p180
      %s183 = sadd.s32 %s182, 1
      %p186 = scmp.eq.s32.totalorder %s22, 1
      %p187 = scmp.ne.s32.totalorder %s182, %s184
      %p188 = scmp.eq.s32.totalorder %s22, 0
      %p189 = por %p187, %p188
      %p190 = scmp.ne.s32.totalorder %s182, %s184
      %p191 = scmp.eq.s32.totalorder %s27, 1
      %p192 = por %p190, %p191
      %p193 = scmp.ne.s32.totalorder %s184, %s185
      %p194 = scmp.eq.s32.totalorder %s27, 0
      %p195 = por %p193, %p194
      %p196 = scmp.ne.s32.totalorder %s184, %s185
      %p197 = scmp.eq.s32.totalorder %s28, 1
      %p198 = por %p196, %p197
      %p200 = scmp.ne.s32.totalorder %s185, %s199
      %p201 = scmp.eq.s32.totalorder %s28, 0
      %p202 = por %p200, %p201
      %s204 = sadd.s32 %s203, 1
      %p207 = scmp.eq.s32.totalorder %s22, 1
      %p208 = scmp.ne.s32.totalorder %s203, %s205
      %p209 = scmp.eq.s32.totalorder %s22, 0
      %p210 = por %p208, %p209
      %p211 = scmp.ne.s32.totalorder %s203, %s205
      %p212 = scmp.eq.s32.totalorder %s27, 1
      %p213 = por %p211, %p212
      %p214 = scmp.ne.s32.totalorder %s205, %s206
      %p215 = scmp.eq.s32.totalorder %s27, 0
      %p216 = por %p214, %p215
      %p217 = scmp.ne.s32.totalorder %s205, %s206
      %p218 = scmp.eq.s32.totalorder %s28, 1
      %p219 = por %p217, %p218
      %p221 = scmp.ne.s32.totalorder %s206, %s220
      %p222 = scmp.eq.s32.totalorder %s28, 0
      %p223 = por %p221, %p222
      %s225 = sadd.s32 %s224, 1
      %p228 = scmp.eq.s32.totalorder %s22, 1
      %p229 = scmp.ne.s32.totalorder %s224, %s226
      %p230 = scmp.eq.s32.totalorder %s22, 0
      %p231 = por %p229, %p230
      %p232 = scmp.ne.s32.totalorder %s224, %s226
      %p233 = scmp.eq.s32.totalorder %s27, 1
      %p234 = por %p232, %p233
      %p235 = scmp.ne.s32.totalorder %s226, %s227
      %p236 = scmp.eq.s32.totalorder %s27, 0
      %p237 = por %p235, %p236
      %p238 = scmp.ne.s32.totalorder %s226, %s227
      %p239 = scmp.eq.s32.totalorder %s28, 1
      %p240 = por %p238, %p239
      %p242 = scmp.ne.s32.totalorder %s227, %s241
      %p243 = scmp.eq.s32.totalorder %s28, 0
      %p244 = por %p242, %p243
      %s246 = sadd.s32 %s245, 1
      %p249 = scmp.eq.s32.totalorder %s22, 1
      %p250 = scmp.ne.s32.totalorder %s245, %s247
      %p251 = scmp.eq.s32.totalorder %s22, 0
      %p252 = por %p250, %p251
      %p253 = scmp.ne.s32.totalorder %s245, %s247
      %p254 = scmp.eq.s32.totalorder %s27, 1
      %p255 = por %p253, %p254
      %p256 = scmp.ne.s32.totalorder %s247, %s248
      %p257 = scmp.eq.s32.totalorder %s27, 0
      %p258 = por %p256, %p257
      %p259 = scmp.ne.s32.totalorder %s247, %s248
      %p260 = scmp.eq.s32.totalorder %s28, 1
      %p261 = por %p259, %p260
      %p263 = scmp.ne.s32.totalorder %s248, %s262
      %p264 = scmp.eq.s32.totalorder %s28, 0
      %p265 = por %p263, %p264
      %s267 = sadd.s32 %s266, 1
      %p270 = scmp.eq.s32.totalorder %s22, 1
      %p271 = scmp.ne.s32.totalorder %s266, %s268
      %p272 = scmp.eq.s32.totalorder %s22, 0
      %p273 = por %p271, %p272
      %p274 = scmp.ne.s32.totalorder %s266, %s268
      %p275 = scmp.eq.s32.totalorder %s27, 1
      %p276 = por %p274, %p275
      %p277 = scmp.ne.s32.totalorder %s268, %s269
      %p278 = scmp.eq.s32.totalorder %s27, 0
      %p279 = por %p277, %p278
      %p280 = scmp.ne.s32.totalorder %s268, %s269
      %p281 = scmp.eq.s32.totalorder %s28, 1
      %p282 = por %p280, %p281
      %p284 = scmp.ne.s32.totalorder %s269, %s283
      %p285 = scmp.eq.s32.totalorder %s28, 0
      %p286 = por %p284, %p285
      %s287 = ssub.s32 %s22, %s29
      %p288 = scmp.eq.s32.totalorder %s287, 0
      %s290 = sadd.s32 %s289, 1
      %s291 = scalar_select %p288, %s289, %s290
      %p294 = pneg %p288
      %p295 = scmp.eq.s32.totalorder %s22, 1
      %p296 = por %p294, %p295
      %p297 = scmp.ne.s32.totalorder %s289, %s292
      %p298 = scmp.eq.s32.totalorder %s22, 0
      %p299 = por %p297, %p298
      %p300 = scmp.ne.s32.totalorder %s289, %s292
      %p301 = scmp.eq.s32.totalorder %s27, 1
      %p302 = por %p300, %p301
      %p303 = scmp.ne.s32.totalorder %s292, %s293
      %p304 = scmp.eq.s32.totalorder %s27, 0
      %p305 = por %p303, %p304
      %p306 = scmp.ne.s32.totalorder %s292, %s293
      %p307 = scmp.eq.s32.totalorder %s28, 1
      %p308 = por %p306, %p307
      %p310 = scmp.ne.s32.totalorder %s293, %s309
      %p311 = scmp.eq.s32.totalorder %s28, 0
      %p312 = por %p310, %p311
      %p313 = scmp.le.s32.totalorder 1, %s22
      %p314 = scmp.lt.s32.totalorder %s22, 3
      %p315 = pnand %p313, %p314
      %p316 = pneg %p315
      // Predicated region
      $region9: #{decoder_block_forward.3} parent=5 // pred_check
        _
      $region10: #{decoder_block_forward.3} parent=5 // pred_check_branch
        %318 = sbr.rel (%p315) target = $region12
      $region11: #{decoder_block_forward.3} parent=5 // pred_region
        %s319 = ssub.s32 %s22, 1
        // Predicated region
        $region13: #{decoder_block_forward.3} parent=11 // pred_check
          %p320 = pneg %p69
        $region14: #{decoder_block_forward.3} parent=11 // pred_check_branch
          %322 = sbr.rel (%p320) target = $region16
        $region15: #{decoder_block_forward.3} parent=11 // pred_region
          _
        $region16: #{decoder_block_forward.3} parent=11 // pred_fallthru
          _
        // Predicated region
        $region17: #{decoder_block_forward.3} parent=11 // pred_check
          %p323 = pneg %p90
        $region18: #{decoder_block_forward.3} parent=11 // pred_check_branch
          %325 = sbr.rel (%p323) target = $region20
        $region19: #{decoder_block_forward.3} parent=11 // pred_region
          %327 = vsyncadd [#allocation3], 0
          %s329 = sshll.u32 %s2, 4
          %s330 = int_to_ptr.hbm [resolvable:$true] %s329
          %s331 = sshll.u32 [#allocation2], 4
          %s332 = int_to_ptr.vmem [resolvable:$true] %s331
          %334 = dma.hbm_to_vmem [thread:$0]  %s330, 16, %s332, [#allocation3]
        $region20: #{decoder_block_forward.3} parent=11 // pred_fallthru
          _
        // Predicated region
        $region21: #{decoder_block_forward.3} parent=11 // pred_check
          %p335 = pneg %p111
        $region22: #{decoder_block_forward.3} parent=11 // pred_check_branch
          %337 = sbr.rel (%p335) target = $region24
        $region23: #{decoder_block_forward.3} parent=11 // pred_region
          %339 = vsyncadd [#allocation5], 0
          %s340 = sshll.u32 %s3, 4
          %s341 = int_to_ptr.hbm [resolvable:$true] %s340
          %s342 = sshll.u32 [#allocation4], 4
          %s343 = int_to_ptr.vmem [resolvable:$true] %s342
          %348 = dma.hbm_to_vmem [thread:$0]  %s341, 256, %s343, [#allocation5], 64, 64, 4
        $region24: #{decoder_block_forward.3} parent=11 // pred_fallthru
          _
        // Predicated region
        $region25: #{decoder_block_forward.3} parent=11 // pred_check
          %p349 = pneg %p132
        $region26: #{decoder_block_forward.3} parent=11 // pred_check_branch
          %351 = sbr.rel (%p349) target = $region28
        $region27: #{decoder_block_forward.3} parent=11 // pred_region
          %353 = vsyncadd [#allocation5], 0
          %s355 = sshll.u32 %s4, 4
          %s356 = int_to_ptr.hbm [resolvable:$true] %s355
          %s357 = sshll.u32 [#allocation6], 4
          %s358 = int_to_ptr.vmem [resolvable:$true] %s357
          %360 = dma.hbm_to_vmem [thread:$0]  %s356, 16, %s358, [#allocation5]
        $region28: #{decoder_block_forward.3} parent=11 // pred_fallthru
          _
        // Predicated region
        $region29: #{decoder_block_forward.3} parent=11 // pred_check
          %p361 = pneg %p153
        $region30: #{decoder_block_forward.3} parent=11 // pred_check_branch
          %363 = sbr.rel (%p361) target = $region32
        $region31: #{decoder_block_forward.3} parent=11 // pred_region
          _
        $region32: #{decoder_block_forward.3} parent=11 // pred_fallthru
          _
        // Predicated region
        $region33: #{decoder_block_forward.3} parent=11 // pred_check
          %p364 = pneg %p174
        $region34: #{decoder_block_forward.3} parent=11 // pred_check_branch
          %366 = sbr.rel (%p364) target = $region36
        $region35: #{decoder_block_forward.3} parent=11 // pred_region
          _
        $region36: #{decoder_block_forward.3} parent=11 // pred_fallthru
          _
        // Predicated region
        $region37: #{decoder_block_forward.3} parent=11 // pred_check
          %p367 = pneg %p195
        $region38: #{decoder_block_forward.3} parent=11 // pred_check_branch
          %369 = sbr.rel (%p367) target = $region40
        $region39: #{decoder_block_forward.3} parent=11 // pred_region
          _
        $region40: #{decoder_block_forward.3} parent=11 // pred_fallthru
          _
        // Predicated region
        $region41: #{decoder_block_forward.3} parent=11 // pred_check
          %p370 = pneg %p216
        $region42: #{decoder_block_forward.3} parent=11 // pred_check_branch
          %372 = sbr.rel (%p370) target = $region44
        $region43: #{decoder_block_forward.3} parent=11 // pred_region
          %374 = vsyncadd [#allocation8], 0
          %s375 = sshll.u32 %s8, 4
          %s376 = int_to_ptr.hbm [resolvable:$true] %s375
          %s377 = sshll.u32 [#allocation7], 4
          %s378 = int_to_ptr.vmem [resolvable:$true] %s377
          %383 = dma.hbm_to_vmem [thread:$0]  %s376, 256, %s378, [#allocation8], 64, 64, 4
        $region44: #{decoder_block_forward.3} parent=11 // pred_fallthru
          _
        // Predicated region
        $region45: #{decoder_block_forward.3} parent=11 // pred_check
          %p384 = pneg %p237
        $region46: #{decoder_block_forward.3} parent=11 // pred_check_branch
          %386 = sbr.rel (%p384) target = $region48
        $region47: #{decoder_block_forward.3} parent=11 // pred_region
          %388 = vsyncadd [#allocation8], 0
          %s390 = sshll.u32 %s9, 4
          %s391 = int_to_ptr.hbm [resolvable:$true] %s390
          %s392 = sshll.u32 [#allocation9], 4
          %s393 = int_to_ptr.vmem [resolvable:$true] %s392
          %395 = dma.hbm_to_vmem [thread:$0]  %s391, 16, %s393, [#allocation8]
        $region48: #{decoder_block_forward.3} parent=11 // pred_fallthru
          _
        // Predicated region
        $region49: #{decoder_block_forward.3} parent=11 // pred_check
          %p396 = pneg %p258
        $region50: #{decoder_block_forward.3} parent=11 // pred_check_branch
          %398 = sbr.rel (%p396) target = $region52
        $region51: #{decoder_block_forward.3} parent=11 // pred_region
          %400 = vsyncadd [#allocation11], 0
          %s402 = sshll.u32 %s10, 4
          %s403 = int_to_ptr.hbm [resolvable:$true] %s402
          %s404 = sshll.u32 [#allocation10], 4
          %s405 = int_to_ptr.vmem [resolvable:$true] %s404
          %407 = dma.hbm_to_vmem [thread:$0]  %s403, 16, %s405, [#allocation11]
        $region52: #{decoder_block_forward.3} parent=11 // pred_fallthru
          _
        // Predicated region
        $region53: #{decoder_block_forward.3} parent=11 // pred_check
          %p408 = pneg %p279
        $region54: #{decoder_block_forward.3} parent=11 // pred_check_branch
          %410 = sbr.rel (%p408) target = $region56
        $region55: #{decoder_block_forward.3} parent=11 // pred_region
          %412 = vsyncadd [#allocation11], 0
          %s414 = sshll.u32 %s11, 4
          %s415 = int_to_ptr.hbm [resolvable:$true] %s414
          %s416 = sshll.u32 [#allocation12], 4
          %s417 = int_to_ptr.vmem [resolvable:$true] %s416
          %419 = dma.hbm_to_vmem [thread:$0]  %s415, 16, %s417, [#allocation11]
        $region56: #{decoder_block_forward.3} parent=11 // pred_fallthru
          _
      $region12: #{decoder_block_forward.3} parent=5 // pred_fallthru
        _
      %p420 = scmp.lt.s32.totalorder %s22, 2
      // Predicated region
      $region57: #{decoder_block_forward.3} parent=5 // pred_check
        %p421 = pneg %p420
      $region58: #{decoder_block_forward.3} parent=5 // pred_check_branch
        %423 = sbr.rel (%p421) target = $region60
      $region59: #{decoder_block_forward.3} parent=5 // pred_region
        // Predicated region
        $region61: #{decoder_block_forward.3} parent=59 // pred_check
          %p424 = pneg %p42
        $region62: #{decoder_block_forward.3} parent=59 // pred_check_branch
          %426 = sbr.rel (%p424) target = $region64
        $region63: #{decoder_block_forward.3} parent=59 // pred_region
          %p427 = scmp.lt.s32.totalorder %s22, 1
          %s428 = scalar_select %p427, %s22, 1
          %s429 = smul.addr %s428, 8
          %s430 = scalar_lea.vmem %s0, %s429
        $region64: #{decoder_block_forward.3} parent=59 // pred_fallthru
          _
      $region60: #{decoder_block_forward.3} parent=5 // pred_fallthru
        _
      %p431 = scmp.le.s32.totalorder 1, %s22
      %p432 = scmp.lt.s32.totalorder %s22, 3
      %p433 = pnand %p431, %p432
      %p434 = pneg %p433
      // Predicated region
      $region65: #{decoder_block_forward.3} parent=5 // pred_check
        _
      $region66: #{decoder_block_forward.3} parent=5 // pred_check_branch
        %436 = sbr.rel (%p433) target = $region68
      $region67: #{decoder_block_forward.3} parent=5 // pred_region
        %s437 = ssub.s32 %s22, 1
        // Predicated region
        $region69: #{decoder_block_forward.3} parent=67 // pred_check
          %p438 = pneg %p90
        $region70: #{decoder_block_forward.3} parent=67 // pred_check_branch
          %440 = sbr.rel (%p438) target = $region72
        $region71: #{decoder_block_forward.3} parent=67 // pred_region
          %442 = dma.done [#allocation3], 16
        $region72: #{decoder_block_forward.3} parent=67 // pred_fallthru
          _
        // Predicated region
        $region73: #{decoder_block_forward.3} parent=67 // pred_check
          %p443 = pneg %p111
        $region74: #{decoder_block_forward.3} parent=67 // pred_check_branch
          %445 = sbr.rel (%p443) target = $region76
        $region75: #{decoder_block_forward.3} parent=67 // pred_region
          %447 = dma.done [#allocation5], 256
        $region76: #{decoder_block_forward.3} parent=67 // pred_fallthru
          _
        // Predicated region
        $region77: #{decoder_block_forward.3} parent=67 // pred_check
          %p448 = pneg %p132
        $region78: #{decoder_block_forward.3} parent=67 // pred_check_branch
          %450 = sbr.rel (%p448) target = $region80
        $region79: #{decoder_block_forward.3} parent=67 // pred_region
          %452 = dma.done [#allocation5], 16
        $region80: #{decoder_block_forward.3} parent=67 // pred_fallthru
          _
        // Predicated region
        $region81: #{decoder_block_forward.3} parent=67 // pred_check
          %p453 = pneg %p216
        $region82: #{decoder_block_forward.3} parent=67 // pred_check_branch
          %455 = sbr.rel (%p453) target = $region84
        $region83: #{decoder_block_forward.3} parent=67 // pred_region
          %457 = dma.done [#allocation8], 256
        $region84: #{decoder_block_forward.3} parent=67 // pred_fallthru
          _
        // Predicated region
        $region85: #{decoder_block_forward.3} parent=67 // pred_check
          %p458 = pneg %p237
        $region86: #{decoder_block_forward.3} parent=67 // pred_check_branch
          %460 = sbr.rel (%p458) target = $region88
        $region87: #{decoder_block_forward.3} parent=67 // pred_region
          %462 = dma.done [#allocation8], 16
        $region88: #{decoder_block_forward.3} parent=67 // pred_fallthru
          _
        // Predicated region
        $region89: #{decoder_block_forward.3} parent=67 // pred_check
          %p463 = pneg %p258
        $region90: #{decoder_block_forward.3} parent=67 // pred_check_branch
          %465 = sbr.rel (%p463) target = $region92
        $region91: #{decoder_block_forward.3} parent=67 // pred_region
          %467 = dma.done [#allocation11], 16
        $region92: #{decoder_block_forward.3} parent=67 // pred_fallthru
          _
        // Predicated region
        $region93: #{decoder_block_forward.3} parent=67 // pred_check
          %p468 = pneg %p279
        $region94: #{decoder_block_forward.3} parent=67 // pred_check_branch
          %470 = sbr.rel (%p468) target = $region96
        $region95: #{decoder_block_forward.3} parent=67 // pred_region
          %472 = dma.done [#allocation11], 16
        $region96: #{decoder_block_forward.3} parent=67 // pred_fallthru
          _
        %p473 = scmp.lt.s32.totalorder %s27, 1
        %s474 = scalar_select %p473, %s27, 1
        %s475 = smul.addr %s474, 8
        %s476 = scalar_lea.vmem %s0, %s475
        %p477 = pneg %p48
        %p478 = pneg %p45
        %p479 = pneg %p69
        %p480 = pneg %p66
        %p481 = pneg %p90
        %p482 = pneg %p87
        %p483 = pneg %p111
        %p484 = pneg %p108
        %p485 = pneg %p132
        %p486 = pneg %p129
        %p487 = pneg %p153
        %p488 = pneg %p150
        %p489 = pneg %p174
        %p490 = pneg %p171
        %p491 = pneg %p195
        %p492 = pneg %p192
        %p493 = pneg %p216
        %p494 = pneg %p213
        %p495 = pneg %p237
        %p496 = pneg %p234
        %p497 = pneg %p258
        %p498 = pneg %p255
        %p499 = pneg %p279
        %p500 = pneg %p276
        %p501 = pneg %p305
        %p502 = pneg %p302
        %p503 = scmp.lt.s32.totalorder %s27, 1
        %s504 = scalar_select %p503, %s27, 1
        %s505 = smul.addr %s504, 8
        %s506 = scalar_lea.vmem %s12, %s505
        %p507 = scmp.lt.s32.totalorder %s27, 1
        %s508 = scalar_select %p507, %s27, 1
        %s509 = smul.addr %s508, 8
        %s510 = scalar_lea.vmem %s0, %s509
        %p511 = scmp.lt.s32.totalorder %s27, 1
        %s512 = scalar_select %p511, %s27, 1
        %s513 = smul.addr %s512, 8
        %s514 = scalar_lea.vmem %s12, %s513
        %v516 = vld [vmem:[%s510] sm:$0xff]
        %v517 = vpack.c.bf16 %v516, %v516
        %v518 = vld [vmem:[%s1] sm:$0xf]
        %v519 = vld [vmem:[%s1 + $0x4] sm:$0xf]
        %v520 = vld [vmem:[%s1 + $0x8] sm:$0xf]
        %v521 = vld [vmem:[%s1 + $0xc] sm:$0xf]
        %v522 = vld [vmem:[#allocation2] sm:$0x1]
        %v524 = vperm.slane %v522, 0
        %v530 = vunpack.c.l.b16 %v518
        %v531 = vunpack.c.l.b16 %v519
        %v532 = vunpack.c.l.b16 %v520
        %v533 = vunpack.c.l.b16 %v521
        %v534 = vpack.c.b16 %v531, %v530
        %v535 = vpack.c.b16 %v533, %v532
        %vm538 = vcmask 261120
        %v540 = vsel %vm538, %v517, 0
        %542 = vmatpush.bf16.msra.mxu0 0
        %543 = vmatpush.bf16.msra.mxu0 0
        %544 = vmatpush.bf16.msra.mxu0 0
        %545 = vmatpush.bf16.msra.mxu0 0
        %546 = vmatpush.bf16.msra.mxu0 0
        %547 = vmatpush.bf16.msra.mxu0 0
        %548 = vmatpush.bf16.msra.mxu0 %v535
        %549 = vmatpush.bf16.msra.mxu0 %v534
        %550 = vmatmul.bf16.gmra.mxu0 %v540
        %v551 = vpop.f32.mrf.mxu0
        %v552 = vadd.f32 %v524, %v551
        %v553 = vpop.f32.mrf.mxu0
        %554 = vdwg.mxu0
        %v555 = vmax.f32 %v552, 0.0
        %v556 = vadd.f32 %v555, 0.001
        %v557 = vld [vmem:[#allocation4] sm:$0xf]
        %v558 = vld [vmem:[#allocation4 + $0x4] sm:$0xf]
        %v559 = vld [vmem:[#allocation4 + $0x8] sm:$0xf]
        %v560 = vld [vmem:[#allocation4 + $0xc] sm:$0xf]
        %v561 = vld [vmem:[#allocation6] sm:$0x1]
        %v563 = vperm.slane %v561, 0
        %v569 = vunpack.c.l.b16 %v557
        %v570 = vunpack.c.l.b16 %v558
        %v571 = vunpack.c.l.b16 %v559
        %v572 = vunpack.c.l.b16 %v560
        %v573 = vpack.c.b16 %v570, %v569
        %v574 = vpack.c.b16 %v572, %v571
        %577 = vmatpush.bf16.msra.mxu0 0
        %578 = vmatpush.bf16.msra.mxu0 0
        %579 = vmatpush.bf16.msra.mxu0 0
        %580 = vmatpush.bf16.msra.mxu0 0
        %581 = vmatpush.bf16.msra.mxu0 0
        %582 = vmatpush.bf16.msra.mxu0 0
        %583 = vmatpush.bf16.msra.mxu0 %v574
        %584 = vmatpush.bf16.msra.mxu0 %v573
        %585 = vmatmul.bf16.gmra.mxu0 %v540
        %v586 = vpop.f32.mrf.mxu0
        %v587 = vadd.f32 %v563, %v586
        %v588 = vpop.f32.mrf.mxu0
        %589 = vdwg.mxu0
        %v590 = vld [vmem:[%s6] sm:$0xff]
        %592 = vset.pattern.permute.xlu0 0
        %593 = vperm.xlu0 %592, %v590
        %v594 = vpop.permute.xlu0 %593
        %v596 = vmul.f32 %v556, %v594
        %vm597 = vcmask 523264
        %v598 = vsel %vm597, %v596, 0.0
        %v599 = vrot.slane %v598, 4
        %v600 = vadd.f32 %v598, %v599
        %v601 = vrot.slane %v600, 2
        %v602 = vadd.f32 %v600, %v601
        %v603 = vrot.slane %v602, 1
        %v604 = vadd.f32 %v602, %v603
        %v605 = vrcp.pop %v604
        %v606 = vmul.f32 %v556, %v605
        %v607 = vpack.c.bf16 %v606, %v606
        %v608 = vld [vmem:[%s5] sm:$0xf]
        %v609 = vld [vmem:[%s5 + $0x4] sm:$0xf]
        %v610 = vld [vmem:[%s5 + $0x8] sm:$0xf]
        %v611 = vld [vmem:[%s5 + $0xc] sm:$0xf]
        %v612 = vld [vmem:[%s5 + $0x10] sm:$0xf]
        %v613 = vld [vmem:[%s5 + $0x14] sm:$0xf]
        %v614 = vld [vmem:[%s5 + $0x18] sm:$0xf]
        %v615 = vld [vmem:[%s5 + $0x1c] sm:$0xf]
        %v624 = vunpack.c.l.b16 %v608
        %v625 = vunpack.c.l.b16 %v609
        %v626 = vunpack.c.l.b16 %v610
        %v627 = vunpack.c.l.b16 %v611
        %v628 = vunpack.c.l.b16 %v612
        %v629 = vunpack.c.l.b16 %v613
        %v630 = vunpack.c.l.b16 %v614
        %v631 = vunpack.c.l.b16 %v615
        %v632 = vpack.c.b16 %v625, %v624
        %v633 = vpack.c.b16 %v627, %v626
        %v634 = vpack.c.b16 %v629, %v628
        %v635 = vpack.c.b16 %v631, %v630
        %v641 = vsel %vm597, %v607, 0
        %643 = vmatpush.bf16.msra.mxu0 0
        %644 = vmatpush.bf16.msra.mxu0 0
        %645 = vmatpush.bf16.msra.mxu0 0
        %646 = vmatpush.bf16.msra.mxu0 0
        %647 = vmatpush.bf16.msra.mxu0 %v635
        %648 = vmatpush.bf16.msra.mxu0 %v634
        %649 = vmatpush.bf16.msra.mxu0 %v633
        %650 = vmatpush.bf16.msra.mxu0 %v632
        %651 = vmatmul.bf16.gmra.mxu0 %v641
        %v652 = vpop.f32.mrf.mxu0
        %v653 = vadd.f32 0.0, %v652
        %v654 = vpop.f32.mrf.mxu0
        %655 = vdwg.mxu0
        %v656 = vmul.f32 %v653, %v587
        %v657 = vld [vmem:[%s7] sm:$0xff]
        %v658 = vld [vmem:[#allocation7] sm:$0xf]
        %v659 = vld [vmem:[#allocation7 + $0x4] sm:$0xf]
        %v660 = vld [vmem:[#allocation7 + $0x8] sm:$0xf]
        %v661 = vld [vmem:[#allocation7 + $0xc] sm:$0xf]
        %v662 = vld [vmem:[#allocation9] sm:$0x1]
        %v663 = vld [vmem:[#allocation10] sm:$0x1]
        %v664 = vld [vmem:[#allocation12] sm:$0x1]
        %vm665 = vcmask 64512
        %v667 = vsel %vm665, %v657, 0
        %669 = vmatpush.msra.mxu0 0.0
        %670 = vmatpush.msra.mxu0 0.0
        %671 = vmatpush.msra.mxu0 0.0
        %672 = vmatpush.msra.mxu0 0.0
        %673 = vmatpush.msra.mxu0 0.0
        %674 = vmatpush.msra.mxu0 0.0
        %675 = vmatpush.msra.mxu0 0.0
        %676 = vmatpush.msra.mxu0 0.0
        %677 = vmatpush.msra.mxu0 0.0
        %678 = vmatpush.msra.mxu0 0.0
        %679 = vmatpush.msra.mxu0 0.0
        %680 = vmatpush.msra.mxu0 0.0
        %681 = vmatpush.msra.mxu0 0.0
        %682 = vmatpush.msra.mxu0 0.0
        %683 = vmatpush.msra.mxu0 0.0
        %684 = vmatpush.msra.mxu0 %v656
        %685 = vmatmul.f32.gmra.mxu0 %v667
        %v686 = vpop.f32.mrf.mxu0
        %v687 = vadd.f32 0.0, %v686
        %688 = vdwg.mxu0
        %v689 = vpack.c.bf16 %v687, %v687
        %v691 = vperm.slane %v662, 0
        %v697 = vunpack.c.l.b16 %v658
        %v698 = vunpack.c.l.b16 %v659
        %v699 = vunpack.c.l.b16 %v660
        %v700 = vunpack.c.l.b16 %v661
        %v701 = vpack.c.b16 %v698, %v697
        %v702 = vpack.c.b16 %v700, %v699
        %v706 = vsel %vm538, %v689, 0
        %708 = vmatpush.bf16.msra.mxu0 0
        %709 = vmatpush.bf16.msra.mxu0 0
        %710 = vmatpush.bf16.msra.mxu0 0
        %711 = vmatpush.bf16.msra.mxu0 0
        %712 = vmatpush.bf16.msra.mxu0 0
        %713 = vmatpush.bf16.msra.mxu0 0
        %714 = vmatpush.bf16.msra.mxu0 %v702
        %715 = vmatpush.bf16.msra.mxu0 %v701
        %716 = vmatmul.bf16.gmra.mxu0 %v706
        %v717 = vpop.f32.mrf.mxu0
        %v718 = vadd.f32 %v691, %v717
        %v719 = vpop.f32.mrf.mxu0
        %720 = vdwg.mxu0
        %v721 = vadd.f32 %v718, %v516
        %v722 = vsel %vm538, %v721, 0.0
        %723 = vadd.xlane.f32.xlu0 %v722
        %v724 = vpop.xlane.xlu0 %723
        %v725 = vrcp.pop 32.0
        %v726 = vmul.f32 32.0, %v725
        %v727 = vsub.f32 1.0, %v726
        %v728 = vmul.f32 %v725, %v727
        %v729 = vadd.f32 %v725, %v728
        %vm730 = vweird.f32 %v725
        %v731 = vsel %vm730, %v725, %v729
        %v732 = vmul.f32 %v724, %v731
        %v733 = vsub.f32 %v721, %v732
        %v734 = vmul.f32 %v733, %v733
        %v735 = vsel %vm538, %v734, 0.0
        %736 = vadd.xlane.f32.xlu0 %v735
        %v737 = vpop.xlane.xlu0 %736
        %v738 = vmul.f32 %v737, %v731
        %v739 = vadd.f32 %v738, 1e-05
        %v740 = vrsqrt.pop %v739
        %v741 = vmul.f32 %v740, %v739
        %v742 = vmul.f32 %v741, %v740
        %v743 = vmul.f32 0.5, %v742
        %v744 = vsub.f32 1.5, %v743
        %v745 = vmul.f32 %v740, %v744
        %vm746 = vweird.f32 %v739
        %vm747 = vweird.f32 %v740
        %vm748 = vmor %vm746, %vm747
        %v749 = vsel %vm748, %v740, %v745
        %v750 = vmul.f32 %v733, %v749
        %v752 = vperm.slane %v663, 0
        %v754 = vmul.f32 %v750, %v752
        %v756 = vperm.slane %v664, 0
        %v758 = vadd.f32 %v754, %v756
        %759 = vst.msk [vmem:[%s514] sm:$0xff] %vm538, %v758
        %p760 = scmp.lt.s32.totalorder %s27, 1
        %s761 = scalar_select %p760, %s27, 1
        %s762 = smul.addr %s761, 8
        %s763 = scalar_lea.vmem %s12, %s762
        // Predicated region
        $region97: #{decoder_block_forward.3} parent=67 // pred_check
          %p764 = pneg %p302
        $region98: #{decoder_block_forward.3} parent=67 // pred_check_branch
          %766 = sbr.rel (%p764) target = $region100
        $region99: #{decoder_block_forward.3} parent=67 // pred_region
          _
        $region100: #{decoder_block_forward.3} parent=67 // pred_fallthru
          _
      $region68: #{decoder_block_forward.3} parent=5 // pred_fallthru
        _
      %p767 = scmp.le.s32.totalorder 2, %s22
      // Predicated region
      $region101: #{decoder_block_forward.3} parent=5 // pred_check
        %p768 = pneg %p767
      $region102: #{decoder_block_forward.3} parent=5 // pred_check_branch
        %770 = sbr.rel (%p768) target = $region104
      $region103: #{decoder_block_forward.3} parent=5 // pred_region
        %s771 = ssub.s32 %s22, 2
        // Predicated region
        $region105: #{decoder_block_forward.3} parent=103 // pred_check
          %p772 = pneg %p308
        $region106: #{decoder_block_forward.3} parent=103 // pred_check_branch
          %774 = sbr.rel (%p772) target = $region108
        $region107: #{decoder_block_forward.3} parent=103 // pred_region
          %p775 = scmp.lt.s32.totalorder %s28, 1
          %s776 = scalar_select %p775, %s28, 1
          %s777 = smul.addr %s776, 8
          %s778 = scalar_lea.vmem %s12, %s777
        $region108: #{decoder_block_forward.3} parent=103 // pred_fallthru
          _
      $region104: #{decoder_block_forward.3} parent=5 // pred_fallthru
        _
    $region6: #{decoder_block_forward.3} parent=1 // loop_footer
      %s26 = sadd.s32 1, %s22
    $region7: #{decoder_block_forward.3} parent=1 // loop_footer_branch
      %21 = sbr.rel target = $region3
    $region8: #{decoder_block_forward.3} parent=1 // loop_exit
      _
    %779 = vsyncpa [#allocation3], 1
    %s780 = scalar_lea.sflag [#allocation3], 1
    %781 = vsyncpa %s780, 1
    %782 = vsyncpa [#allocation5], 1
    %783 = vsyncpa [#allocation8], 1
    %784 = vsyncpa [#allocation11], 1

// kernel: decoder_block_forward.4
$region0: #{decoder_block_forward.4}
  #allocation0 [shape = 'u32[]', space=smem, size = 0x4, offset = 0x4, fixed_abs, tag = 'smem constant byte address 0x4 - core index']
  #allocation1 [shape = 'u32[72,128]{1,0:T(1,128)}', space=vmem, size = 0x9000, scoped, tag = 'internal scratch']
  %s0 = inlined_call_operand.vmem [shape: f32[2,8,32], index: 0, kind: input, shape index: {}]
  %s1 = inlined_call_operand.vmem [shape: f32[2,8,32], index: 1, kind: input, shape index: {}]
  %s2 = inlined_call_operand.vmem [shape: f32[2,8,32], index: 2, kind: input, shape index: {}]
  %s3 = inlined_call_operand.hbm [shape: bf16[32,64], index: 3, kind: input, shape index: {}]
  %s4 = inlined_call_operand.hbm [shape: f32[1,64], index: 4, kind: input, shape index: {}]
  %s5 = inlined_call_operand.hbm [shape: bf16[32,64], index: 5, kind: input, shape index: {}]
  %s6 = inlined_call_operand.hbm [shape: f32[1,64], index: 6, kind: input, shape index: {}]
  %s7 = inlined_call_operand.hbm [shape: bf16[32,32], index: 7, kind: input, shape index: {}]
  %s8 = inlined_call_operand.hbm [shape: f32[1,32], index: 8, kind: input, shape index: {}]
  %s9 = inlined_call_operand.vmem [shape: bf16[64,32], index: 9, kind: input, shape index: {}]
  %s10 = inlined_call_operand.hbm [shape: bf16[32,32], index: 10, kind: input, shape index: {}]
  %s11 = inlined_call_operand.hbm [shape: f32[1,32], index: 11, kind: input, shape index: {}]
  %s12 = inlined_call_operand.vmem [shape: f32[1,32], index: 12, kind: input, shape index: {}]
  %s13 = inlined_call_operand.vmem [shape: f32[1,32], index: 13, kind: input, shape index: {}]
  %s14 = inlined_call_operand.vmem [shape: f32[2,8,32], index: 14, kind: output, shape index: {}]
  %s15 = sld [smem:[#allocation0]]
  $region121: #{decoder_block_forward.4} parent=0
    _
  %s17 = ssub.s32 1, %s15
  %s18 = scalar_select 0, %s17, %s15
  $region1: #{decoder_block_forward.4} parent=0
    #allocation2 [shape = 'u8[8192]{0}', space=vmem, size = 0x2000, scoped, tag = 'input window, operand 3, single buffered']
    #allocation3 [shape = 's32[2]{0}', space=sflag, size = 0x8, scoped, tag = 'scoped memory for decoder_block_forward.4']
    #allocation4 [shape = 'u8[512]{0}', space=vmem, size = 0x400, scoped, tag = 'input window, operand 4, single buffered']
    #allocation5 [shape = 's32[1]{0}', space=sflag, size = 0x4, scoped, tag = 'scoped memory for decoder_block_forward.4']
    #allocation6 [shape = 'u8[8192]{0}', space=vmem, size = 0x2000, scoped, tag = 'input window, operand 5, single buffered']
    #allocation7 [shape = 'u8[512]{0}', space=vmem, size = 0x400, scoped, tag = 'input window, operand 6, single buffered']
    #allocation8 [shape = 's32[1]{0}', space=sflag, size = 0x4, scoped, tag = 'scoped memory for decoder_block_forward.4']
    #allocation9 [shape = 'u8[8192]{0}', space=vmem, size = 0x2000, scoped, tag = 'input window, operand 7, single buffered']
    #allocation10 [shape = 'u8[512]{0}', space=vmem, size = 0x400, scoped, tag = 'input window, operand 8, single buffered']
    #allocation11 [shape = 's32[1]{0}', space=sflag, size = 0x4, scoped, tag = 'scoped memory for decoder_block_forward.4']
    #allocation12 [shape = 'u8[8192]{0}', space=vmem, size = 0x2000, scoped, tag = 'input window, operand 10, single buffered']
    #allocation13 [shape = 'u8[512]{0}', space=vmem, size = 0x400, scoped, tag = 'input window, operand 11, single buffered']
    #allocation14 [shape = 's32[1]{0}', space=sflag, size = 0x4, scoped, tag = 'scoped memory for decoder_block_forward.4']
    %19 = vsyncpa [#allocation3], 0
    %20 = vsyncpa [#allocation5], 0
    %21 = vsyncpa [#allocation8], 0
    %22 = vsyncpa [#allocation11], 0
    %23 = vsyncpa [#allocation14], 0
    loop: start=0, step=1, limit=4
    $region2: #{decoder_block_forward.4} parent=1 // loop_pre_header
      _
    $region3: #{decoder_block_forward.4} parent=1 // loop_header
      %s25 = sphi 0, %s29
      %p26 = scmp.ge.s32.totalorder %s25, 4
      %s35 = sphi 0, %s37
      %s38 = sphi 0, %s35
      %s39 = sphi 0, %s38
      %s55 = sphi 0, %s39
      %s61 = sphi 0, %s63
      %s64 = sphi 0, %s61
      %s65 = sphi 0, %s64
      %s81 = sphi 0, %s65
      %s87 = sphi 0, %s89
      %s90 = sphi 0, %s87
      %s91 = sphi 0, %s90
      %s107 = sphi 0, %s91
      %s111 = sphi 0, %s111
      %s113 = sphi 0, %s111
      %s114 = sphi 0, %s113
      %s128 = sphi 0, %s114
      %s132 = sphi 0, %s132
      %s134 = sphi 0, %s132
      %s135 = sphi 0, %s134
      %s149 = sphi 0, %s135
      %s153 = sphi 0, %s153
      %s155 = sphi 0, %s153
      %s156 = sphi 0, %s155
      %s170 = sphi 0, %s156
      %s174 = sphi 0, %s174
      %s176 = sphi 0, %s174
      %s177 = sphi 0, %s176
      %s191 = sphi 0, %s177
      %s195 = sphi 0, %s195
      %s197 = sphi 0, %s195
      %s198 = sphi 0, %s197
      %s212 = sphi 0, %s198
      %s216 = sphi 0, %s216
      %s218 = sphi 0, %s216
      %s219 = sphi 0, %s218
      %s233 = sphi 0, %s219
      %s237 = sphi 0, %s237
      %s239 = sphi 0, %s237
      %s240 = sphi 0, %s239
      %s254 = sphi 0, %s240
      %s258 = sphi 0, %s258
      %s260 = sphi 0, %s258
      %s261 = sphi 0, %s260
      %s275 = sphi 0, %s261
      %s279 = sphi 0, %s279
      %s281 = sphi 0, %s279
      %s282 = sphi 0, %s281
      %s296 = sphi 0, %s282
      %s300 = sphi 0, %s300
      %s302 = sphi 0, %s300
      %s303 = sphi 0, %s302
      %s317 = sphi 0, %s303
      %s321 = sphi 0, %s321
      %s323 = sphi 0, %s321
      %s324 = sphi 0, %s323
      %s338 = sphi 0, %s324
      %s344 = sphi 0, %s346
      %s347 = sphi 0, %s344
      %s348 = sphi 0, %s347
      %s364 = sphi 0, %s348
    $region4: #{decoder_block_forward.4} parent=1 // loop_header_branch
      %28 = sbr.rel (%p26) target = $region8
    $region5: #{decoder_block_forward.4} parent=1 // loop_body
      %s30 = ssub.s32 %s25, 1
      %s31 = ssub.s32 %s25, 2
      %s32 = sadd.s32 %s25, 1
      %s33 = ssub.s32 %s25, %s32
      %p34 = scmp.eq.s32.totalorder %s33, 0
      %s36 = sadd.s32 %s35, 1
      %s37 = scalar_select %p34, %s35, %s36
      %p40 = pneg %p34
      %p41 = scmp.eq.s32.totalorder %s25, 1
      %p42 = por %p40, %p41
      %p43 = scmp.ne.s32.totalorder %s35, %s38
      %p44 = scmp.eq.s32.totalorder %s25, 0
      %p45 = por %p43, %p44
      %p46 = scmp.ne.s32.totalorder %s35, %s38
      %p47 = scmp.eq.s32.totalorder %s30, 1
      %p48 = por %p46, %p47
      %p49 = scmp.ne.s32.totalorder %s38, %s39
      %p50 = scmp.eq.s32.totalorder %s30, 0
      %p51 = por %p49, %p50
      %p52 = scmp.ne.s32.totalorder %s38, %s39
      %p53 = scmp.eq.s32.totalorder %s31, 1
      %p54 = por %p52, %p53
      %p56 = scmp.ne.s32.totalorder %s39, %s55
      %p57 = scmp.eq.s32.totalorder %s31, 0
      %p58 = por %p56, %p57
      %s59 = ssub.s32 %s25, %s32
      %p60 = scmp.eq.s32.totalorder %s59, 0
      %s62 = sadd.s32 %s61, 1
      %s63 = scalar_select %p60, %s61, %s62
      %p66 = pneg %p60
      %p67 = scmp.eq.s32.totalorder %s25, 1
      %p68 = por %p66, %p67
      %p69 = scmp.ne.s32.totalorder %s61, %s64
      %p70 = scmp.eq.s32.totalorder %s25, 0
      %p71 = por %p69, %p70
      %p72 = scmp.ne.s32.totalorder %s61, %s64
      %p73 = scmp.eq.s32.totalorder %s30, 1
      %p74 = por %p72, %p73
      %p75 = scmp.ne.s32.totalorder %s64, %s65
      %p76 = scmp.eq.s32.totalorder %s30, 0
      %p77 = por %p75, %p76
      %p78 = scmp.ne.s32.totalorder %s64, %s65
      %p79 = scmp.eq.s32.totalorder %s31, 1
      %p80 = por %p78, %p79
      %p82 = scmp.ne.s32.totalorder %s65, %s81
      %p83 = scmp.eq.s32.totalorder %s31, 0
      %p84 = por %p82, %p83
      %s85 = ssub.s32 %s25, %s32
      %p86 = scmp.eq.s32.totalorder %s85, 0
      %s88 = sadd.s32 %s87, 1
      %s89 = scalar_select %p86, %s87, %s88
      %p92 = pneg %p86
      %p93 = scmp.eq.s32.totalorder %s25, 1
      %p94 = por %p92, %p93
      %p95 = scmp.ne.s32.totalorder %s87, %s90
      %p96 = scmp.eq.s32.totalorder %s25, 0
      %p97 = por %p95, %p96
      %p98 = scmp.ne.s32.totalorder %s87, %s90
      %p99 = scmp.eq.s32.totalorder %s30, 1
      %p100 = por %p98, %p99
      %p101 = scmp.ne.s32.totalorder %s90, %s91
      %p102 = scmp.eq.s32.totalorder %s30, 0
      %p103 = por %p101, %p102
      %p104 = scmp.ne.s32.totalorder %s90, %s91
      %p105 = scmp.eq.s32.totalorder %s31, 1
      %p106 = por %p104, %p105
      %p108 = scmp.ne.s32.totalorder %s91, %s107
      %p109 = scmp.eq.s32.totalorder %s31, 0
      %p110 = por %p108, %p109
      %s112 = sadd.s32 %s111, 1
      %p115 = scmp.eq.s32.totalorder %s25, 1
      %p116 = scmp.ne.s32.totalorder %s111, %s113
      %p117 = scmp.eq.s32.totalorder %s25, 0
      %p118 = por %p116, %p117
      %p119 = scmp.ne.s32.totalorder %s111, %s113
      %p120 = scmp.eq.s32.totalorder %s30, 1
      %p121 = por %p119, %p120
      %p122 = scmp.ne.s32.totalorder %s113, %s114
      %p123 = scmp.eq.s32.totalorder %s30, 0
      %p124 = por %p122, %p123
      %p125 = scmp.ne.s32.totalorder %s113, %s114
      %p126 = scmp.eq.s32.totalorder %s31, 1
      %p127 = por %p125, %p126
      %p129 = scmp.ne.s32.totalorder %s114, %s128
      %p130 = scmp.eq.s32.totalorder %s31, 0
      %p131 = por %p129, %p130
      %s133 = sadd.s32 %s132, 1
      %p136 = scmp.eq.s32.totalorder %s25, 1
      %p137 = scmp.ne.s32.totalorder %s132, %s134
      %p138 = scmp.eq.s32.totalorder %s25, 0
      %p139 = por %p137, %p138
      %p140 = scmp.ne.s32.totalorder %s132, %s134
      %p141 = scmp.eq.s32.totalorder %s30, 1
      %p142 = por %p140, %p141
      %p143 = scmp.ne.s32.totalorder %s134, %s135
      %p144 = scmp.eq.s32.totalorder %s30, 0
      %p145 = por %p143, %p144
      %p146 = scmp.ne.s32.totalorder %s134, %s135
      %p147 = scmp.eq.s32.totalorder %s31, 1
      %p148 = por %p146, %p147
      %p150 = scmp.ne.s32.totalorder %s135, %s149
      %p151 = scmp.eq.s32.totalorder %s31, 0
      %p152 = por %p150, %p151
      %s154 = sadd.s32 %s153, 1
      %p157 = scmp.eq.s32.totalorder %s25, 1
      %p158 = scmp.ne.s32.totalorder %s153, %s155
      %p159 = scmp.eq.s32.totalorder %s25, 0
      %p160 = por %p158, %p159
      %p161 = scmp.ne.s32.totalorder %s153, %s155
      %p162 = scmp.eq.s32.totalorder %s30, 1
      %p163 = por %p161, %p162
      %p164 = scmp.ne.s32.totalorder %s155, %s156
      %p165 = scmp.eq.s32.totalorder %s30, 0
      %p166 = por %p164, %p165
      %p167 = scmp.ne.s32.totalorder %s155, %s156
      %p168 = scmp.eq.s32.totalorder %s31, 1
      %p169 = por %p167, %p168
      %p171 = scmp.ne.s32.totalorder %s156, %s170
      %p172 = scmp.eq.s32.totalorder %s31, 0
      %p173 = por %p171, %p172
      %s175 = sadd.s32 %s174, 1
      %p178 = scmp.eq.s32.totalorder %s25, 1
      %p179 = scmp.ne.s32.totalorder %s174, %s176
      %p180 = scmp.eq.s32.totalorder %s25, 0
      %p181 = por %p179, %p180
      %p182 = scmp.ne.s32.totalorder %s174, %s176
      %p183 = scmp.eq.s32.totalorder %s30, 1
      %p184 = por %p182, %p183
      %p185 = scmp.ne.s32.totalorder %s176, %s177
      %p186 = scmp.eq.s32.totalorder %s30, 0
      %p187 = por %p185, %p186
      %p188 = scmp.ne.s32.totalorder %s176, %s177
      %p189 = scmp.eq.s32.totalorder %s31, 1
      %p190 = por %p188, %p189
      %p192 = scmp.ne.s32.totalorder %s177, %s191
      %p193 = scmp.eq.s32.totalorder %s31, 0
      %p194 = por %p192, %p193
      %s196 = sadd.s32 %s195, 1
      %p199 = scmp.eq.s32.totalorder %s25, 1
      %p200 = scmp.ne.s32.totalorder %s195, %s197
      %p201 = scmp.eq.s32.totalorder %s25, 0
      %p202 = por %p200, %p201
      %p203 = scmp.ne.s32.totalorder %s195, %s197
      %p204 = scmp.eq.s32.totalorder %s30, 1
      %p205 = por %p203, %p204
      %p206 = scmp.ne.s32.totalorder %s197, %s198
      %p207 = scmp.eq.s32.totalorder %s30, 0
      %p208 = por %p206, %p207
      %p209 = scmp.ne.s32.totalorder %s197, %s198
      %p210 = scmp.eq.s32.totalorder %s31, 1
      %p211 = por %p209, %p210
      %p213 = scmp.ne.s32.totalorder %s198, %s212
      %p214 = scmp.eq.s32.totalorder %s31, 0
      %p215 = por %p213, %p214
      %s217 = sadd.s32 %s216, 1
      %p220 = scmp.eq.s32.totalorder %s25, 1
      %p221 = scmp.ne.s32.totalorder %s216, %s218
      %p222 = scmp.eq.s32.totalorder %s25, 0
      %p223 = por %p221, %p222
      %p224 = scmp.ne.s32.totalorder %s216, %s218
      %p225 = scmp.eq.s32.totalorder %s30, 1
      %p226 = por %p224, %p225
      %p227 = scmp.ne.s32.totalorder %s218, %s219
      %p228 = scmp.eq.s32.totalorder %s30, 0
      %p229 = por %p227, %p228
      %p230 = scmp.ne.s32.totalorder %s218, %s219
      %p231 = scmp.eq.s32.totalorder %s31, 1
      %p232 = por %p230, %p231
      %p234 = scmp.ne.s32.totalorder %s219, %s233
      %p235 = scmp.eq.s32.totalorder %s31, 0
      %p236 = por %p234, %p235
      %s238 = sadd.s32 %s237, 1
      %p241 = scmp.eq.s32.totalorder %s25, 1
      %p242 = scmp.ne.s32.totalorder %s237, %s239
      %p243 = scmp.eq.s32.totalorder %s25, 0
      %p244 = por %p242, %p243
      %p245 = scmp.ne.s32.totalorder %s237, %s239
      %p246 = scmp.eq.s32.totalorder %s30, 1
      %p247 = por %p245, %p246
      %p248 = scmp.ne.s32.totalorder %s239, %s240
      %p249 = scmp.eq.s32.totalorder %s30, 0
      %p250 = por %p248, %p249
      %p251 = scmp.ne.s32.totalorder %s239, %s240
      %p252 = scmp.eq.s32.totalorder %s31, 1
      %p253 = por %p251, %p252
      %p255 = scmp.ne.s32.totalorder %s240, %s254
      %p256 = scmp.eq.s32.totalorder %s31, 0
      %p257 = por %p255, %p256
      %s259 = sadd.s32 %s258, 1
      %p262 = scmp.eq.s32.totalorder %s25, 1
      %p263 = scmp.ne.s32.totalorder %s258, %s260
      %p264 = scmp.eq.s32.totalorder %s25, 0
      %p265 = por %p263, %p264
      %p266 = scmp.ne.s32.totalorder %s258, %s260
      %p267 = scmp.eq.s32.totalorder %s30, 1
      %p268 = por %p266, %p267
      %p269 = scmp.ne.s32.totalorder %s260, %s261
      %p270 = scmp.eq.s32.totalorder %s30, 0
      %p271 = por %p269, %p270
      %p272 = scmp.ne.s32.totalorder %s260, %s261
      %p273 = scmp.eq.s32.totalorder %s31, 1
      %p274 = por %p272, %p273
      %p276 = scmp.ne.s32.totalorder %s261, %s275
      %p277 = scmp.eq.s32.totalorder %s31, 0
      %p278 = por %p276, %p277
      %s280 = sadd.s32 %s279, 1
      %p283 = scmp.eq.s32.totalorder %s25, 1
      %p284 = scmp.ne.s32.totalorder %s279, %s281
      %p285 = scmp.eq.s32.totalorder %s25, 0
      %p286 = por %p284, %p285
      %p287 = scmp.ne.s32.totalorder %s279, %s281
      %p288 = scmp.eq.s32.totalorder %s30, 1
      %p289 = por %p287, %p288
      %p290 = scmp.ne.s32.totalorder %s281, %s282
      %p291 = scmp.eq.s32.totalorder %s30, 0
      %p292 = por %p290, %p291
      %p293 = scmp.ne.s32.totalorder %s281, %s282
      %p294 = scmp.eq.s32.totalorder %s31, 1
      %p295 = por %p293, %p294
      %p297 = scmp.ne.s32.totalorder %s282, %s296
      %p298 = scmp.eq.s32.totalorder %s31, 0
      %p299 = por %p297, %p298
      %s301 = sadd.s32 %s300, 1
      %p304 = scmp.eq.s32.totalorder %s25, 1
      %p305 = scmp.ne.s32.totalorder %s300, %s302
      %p306 = scmp.eq.s32.totalorder %s25, 0
      %p307 = por %p305, %p306
      %p308 = scmp.ne.s32.totalorder %s300, %s302
      %p309 = scmp.eq.s32.totalorder %s30, 1
      %p310 = por %p308, %p309
      %p311 = scmp.ne.s32.totalorder %s302, %s303
      %p312 = scmp.eq.s32.totalorder %s30, 0
      %p313 = por %p311, %p312
      %p314 = scmp.ne.s32.totalorder %s302, %s303
      %p315 = scmp.eq.s32.totalorder %s31, 1
      %p316 = por %p314, %p315
      %p318 = scmp.ne.s32.totalorder %s303, %s317
      %p319 = scmp.eq.s32.totalorder %s31, 0
      %p320 = por %p318, %p319
      %s322 = sadd.s32 %s321, 1
      %p325 = scmp.eq.s32.totalorder %s25, 1
      %p326 = scmp.ne.s32.totalorder %s321, %s323
      %p327 = scmp.eq.s32.totalorder %s25, 0
      %p328 = por %p326, %p327
      %p329 = scmp.ne.s32.totalorder %s321, %s323
      %p330 = scmp.eq.s32.totalorder %s30, 1
      %p331 = por %p329, %p330
      %p332 = scmp.ne.s32.totalorder %s323, %s324
      %p333 = scmp.eq.s32.totalorder %s30, 0
      %p334 = por %p332, %p333
      %p335 = scmp.ne.s32.totalorder %s323, %s324
      %p336 = scmp.eq.s32.totalorder %s31, 1
      %p337 = por %p335, %p336
      %p339 = scmp.ne.s32.totalorder %s324, %s338
      %p340 = scmp.eq.s32.totalorder %s31, 0
      %p341 = por %p339, %p340
      %s342 = ssub.s32 %s25, %s32
      %p343 = scmp.eq.s32.totalorder %s342, 0
      %s345 = sadd.s32 %s344, 1
      %s346 = scalar_select %p343, %s344, %s345
      %p349 = pneg %p343
      %p350 = scmp.eq.s32.totalorder %s25, 1
      %p351 = por %p349, %p350
      %p352 = scmp.ne.s32.totalorder %s344, %s347
      %p353 = scmp.eq.s32.totalorder %s25, 0
      %p354 = por %p352, %p353
      %p355 = scmp.ne.s32.totalorder %s344, %s347
      %p356 = scmp.eq.s32.totalorder %s30, 1
      %p357 = por %p355, %p356
      %p358 = scmp.ne.s32.totalorder %s347, %s348
      %p359 = scmp.eq.s32.totalorder %s30, 0
      %p360 = por %p358, %p359
      %p361 = scmp.ne.s32.totalorder %s347, %s348
      %p362 = scmp.eq.s32.totalorder %s31, 1
      %p363 = por %p361, %p362
      %p365 = scmp.ne.s32.totalorder %s348, %s364
      %p366 = scmp.eq.s32.totalorder %s31, 0
      %p367 = por %p365, %p366
      %p368 = scmp.le.s32.totalorder 1, %s25
      %p369 = scmp.lt.s32.totalorder %s25, 3
      %p370 = pnand %p368, %p369
      %p371 = pneg %p370
      // Predicated region
      $region9: #{decoder_block_forward.4} parent=5 // pred_check
        _
      $region10: #{decoder_block_forward.4} parent=5 // pred_check_branch
        %373 = sbr.rel (%p370) target = $region12
      $region11: #{decoder_block_forward.4} parent=5 // pred_region
        %s374 = ssub.s32 %s25, 1
        // Predicated region
        $region13: #{decoder_block_forward.4} parent=11 // pred_check
          %p375 = pneg %p124
        $region14: #{decoder_block_forward.4} parent=11 // pred_check_branch
          %377 = sbr.rel (%p375) target = $region16
        $region15: #{decoder_block_forward.4} parent=11 // pred_region
          %379 = vsyncadd [#allocation3], 0
          %s380 = sshll.u32 %s3, 4
          %s381 = int_to_ptr.hbm [resolvable:$true] %s380
          %s382 = sshll.u32 [#allocation2], 4
          %s383 = int_to_ptr.vmem [resolvable:$true] %s382
          %388 = dma.hbm_to_vmem [thread:$0]  %s381, 256, %s383, [#allocation3], 64, 64, 4
        $region16: #{decoder_block_forward.4} parent=11 // pred_fallthru
          _
        // Predicated region
        $region17: #{decoder_block_forward.4} parent=11 // pred_check
          %p389 = pneg %p145
        $region18: #{decoder_block_forward.4} parent=11 // pred_check_branch
          %391 = sbr.rel (%p389) target = $region20
        $region19: #{decoder_block_forward.4} parent=11 // pred_region
          %393 = vsyncadd [#allocation5], 0
          %s395 = sshll.u32 %s4, 4
          %s396 = int_to_ptr.hbm [resolvable:$true] %s395
          %s397 = sshll.u32 [#allocation4], 4
          %s398 = int_to_ptr.vmem [resolvable:$true] %s397
          %400 = dma.hbm_to_vmem [thread:$0]  %s396, 16, %s398, [#allocation5]
        $region20: #{decoder_block_forward.4} parent=11 // pred_fallthru
          _
        // Predicated region
        $region21: #{decoder_block_forward.4} parent=11 // pred_check
          %p401 = pneg %p166
        $region22: #{decoder_block_forward.4} parent=11 // pred_check_branch
          %403 = sbr.rel (%p401) target = $region24
        $region23: #{decoder_block_forward.4} parent=11 // pred_region
          %405 = vsyncadd [#allocation5], 0
          %s406 = sshll.u32 %s5, 4
          %s407 = int_to_ptr.hbm [resolvable:$true] %s406
          %s408 = sshll.u32 [#allocation6], 4
          %s409 = int_to_ptr.vmem [resolvable:$true] %s408
          %414 = dma.hbm_to_vmem [thread:$0]  %s407, 256, %s409, [#allocation5], 64, 64, 4
        $region24: #{decoder_block_forward.4} parent=11 // pred_fallthru
          _
        // Predicated region
        $region25: #{decoder_block_forward.4} parent=11 // pred_check
          %p415 = pneg %p187
        $region26: #{decoder_block_forward.4} parent=11 // pred_check_branch
          %417 = sbr.rel (%p415) target = $region28
        $region27: #{decoder_block_forward.4} parent=11 // pred_region
          %419 = vsyncadd [#allocation8], 0
          %s421 = sshll.u32 %s6, 4
          %s422 = int_to_ptr.hbm [resolvable:$true] %s421
          %s423 = sshll.u32 [#allocation7], 4
          %s424 = int_to_ptr.vmem [resolvable:$true] %s423
          %426 = dma.hbm_to_vmem [thread:$0]  %s422, 16, %s424, [#allocation8]
        $region28: #{decoder_block_forward.4} parent=11 // pred_fallthru
          _
        // Predicated region
        $region29: #{decoder_block_forward.4} parent=11 // pred_check
          %p427 = pneg %p208
        $region30: #{decoder_block_forward.4} parent=11 // pred_check_branch
          %429 = sbr.rel (%p427) target = $region32
        $region31: #{decoder_block_forward.4} parent=11 // pred_region
          %431 = vsyncadd [#allocation8], 0
          %s432 = sshll.u32 %s7, 4
          %s433 = int_to_ptr.hbm [resolvable:$true] %s432
          %s434 = sshll.u32 [#allocation9], 4
          %s435 = int_to_ptr.vmem [resolvable:$true] %s434
          %440 = dma.hbm_to_vmem [thread:$0]  %s433, 256, %s435, [#allocation8], 64, 64, 4
        $region32: #{decoder_block_forward.4} parent=11 // pred_fallthru
          _
        // Predicated region
        $region33: #{decoder_block_forward.4} parent=11 // pred_check
          %p441 = pneg %p229
        $region34: #{decoder_block_forward.4} parent=11 // pred_check_branch
          %443 = sbr.rel (%p441) target = $region36
        $region35: #{decoder_block_forward.4} parent=11 // pred_region
          %445 = vsyncadd [#allocation11], 0
          %s447 = sshll.u32 %s8, 4
          %s448 = int_to_ptr.hbm [resolvable:$true] %s447
          %s449 = sshll.u32 [#allocation10], 4
          %s450 = int_to_ptr.vmem [resolvable:$true] %s449
          %452 = dma.hbm_to_vmem [thread:$0]  %s448, 16, %s450, [#allocation11]
        $region36: #{decoder_block_forward.4} parent=11 // pred_fallthru
          _
        // Predicated region
        $region37: #{decoder_block_forward.4} parent=11 // pred_check
          %p453 = pneg %p250
        $region38: #{decoder_block_forward.4} parent=11 // pred_check_branch
          %455 = sbr.rel (%p453) target = $region40
        $region39: #{decoder_block_forward.4} parent=11 // pred_region
          _
        $region40: #{decoder_block_forward.4} parent=11 // pred_fallthru
          _
        // Predicated region
        $region41: #{decoder_block_forward.4} parent=11 // pred_check
          %p456 = pneg %p271
        $region42: #{decoder_block_forward.4} parent=11 // pred_check_branch
          %458 = sbr.rel (%p456) target = $region44
        $region43: #{decoder_block_forward.4} parent=11 // pred_region
          %460 = vsyncadd [#allocation11], 0
          %s461 = sshll.u32 %s10, 4
          %s462 = int_to_ptr.hbm [resolvable:$true] %s461
          %s463 = sshll.u32 [#allocation12], 4
          %s464 = int_to_ptr.vmem [resolvable:$true] %s463
          %469 = dma.hbm_to_vmem [thread:$0]  %s462, 256, %s464, [#allocation11], 64, 64, 4
        $region44: #{decoder_block_forward.4} parent=11 // pred_fallthru
          _
        // Predicated region
        $region45: #{decoder_block_forward.4} parent=11 // pred_check
          %p470 = pneg %p292
        $region46: #{decoder_block_forward.4} parent=11 // pred_check_branch
          %472 = sbr.rel (%p470) target = $region48
        $region47: #{decoder_block_forward.4} parent=11 // pred_region
          %474 = vsyncadd [#allocation14], 0
          %s476 = sshll.u32 %s11, 4
          %s477 = int_to_ptr.hbm [resolvable:$true] %s476
          %s478 = sshll.u32 [#allocation13], 4
          %s479 = int_to_ptr.vmem [resolvable:$true] %s478
          %481 = dma.hbm_to_vmem [thread:$0]  %s477, 16, %s479, [#allocation14]
        $region48: #{decoder_block_forward.4} parent=11 // pred_fallthru
          _
        // Predicated region
        $region49: #{decoder_block_forward.4} parent=11 // pred_check
          %p482 = pneg %p313
        $region50: #{decoder_block_forward.4} parent=11 // pred_check_branch
          %484 = sbr.rel (%p482) target = $region52
        $region51: #{decoder_block_forward.4} parent=11 // pred_region
          _
        $region52: #{decoder_block_forward.4} parent=11 // pred_fallthru
          _
        // Predicated region
        $region53: #{decoder_block_forward.4} parent=11 // pred_check
          %p485 = pneg %p334
        $region54: #{decoder_block_forward.4} parent=11 // pred_check_branch
          %487 = sbr.rel (%p485) target = $region56
        $region55: #{decoder_block_forward.4} parent=11 // pred_region
          _
        $region56: #{decoder_block_forward.4} parent=11 // pred_fallthru
          _
      $region12: #{decoder_block_forward.4} parent=5 // pred_fallthru
        _
      %p488 = scmp.lt.s32.totalorder %s25, 2
      // Predicated region
      $region57: #{decoder_block_forward.4} parent=5 // pred_check
        %p489 = pneg %p488
      $region58: #{decoder_block_forward.4} parent=5 // pred_check_branch
        %491 = sbr.rel (%p489) target = $region60
      $region59: #{decoder_block_forward.4} parent=5 // pred_region
        // Predicated region
        $region61: #{decoder_block_forward.4} parent=59 // pred_check
          %p492 = pneg %p45
        $region62: #{decoder_block_forward.4} parent=59 // pred_check_branch
          %494 = sbr.rel (%p492) target = $region64
        $region63: #{decoder_block_forward.4} parent=59 // pred_region
          %p495 = scmp.lt.s32.totalorder %s25, 1
          %s496 = scalar_select %p495, %s25, 1
          %s497 = smul.addr %s496, 8
          %s498 = scalar_lea.vmem %s0, %s497
        $region64: #{decoder_block_forward.4} parent=59 // pred_fallthru
          _
        // Predicated region
        $region65: #{decoder_block_forward.4} parent=59 // pred_check
          %p499 = pneg %p71
        $region66: #{decoder_block_forward.4} parent=59 // pred_check_branch
          %501 = sbr.rel (%p499) target = $region68
        $region67: #{decoder_block_forward.4} parent=59 // pred_region
          %p502 = scmp.lt.s32.totalorder %s25, 1
          %s503 = scalar_select %p502, %s25, 1
          %s504 = smul.addr %s503, 8
          %s505 = scalar_lea.vmem %s1, %s504
        $region68: #{decoder_block_forward.4} parent=59 // pred_fallthru
          _
        // Predicated region
        $region69: #{decoder_block_forward.4} parent=59 // pred_check
          %p506 = pneg %p97
        $region70: #{decoder_block_forward.4} parent=59 // pred_check_branch
          %508 = sbr.rel (%p506) target = $region72
        $region71: #{decoder_block_forward.4} parent=59 // pred_region
          %p509 = scmp.lt.s32.totalorder %s25, 1
          %s510 = scalar_select %p509, %s25, 1
          %s511 = smul.addr %s510, 8
          %s512 = scalar_lea.vmem %s2, %s511
        $region72: #{decoder_block_forward.4} parent=59 // pred_fallthru
          _
      $region60: #{decoder_block_forward.4} parent=5 // pred_fallthru
        _
      %p513 = scmp.le.s32.totalorder 1, %s25
      %p514 = scmp.lt.s32.totalorder %s25, 3
      %p515 = pnand %p513, %p514
      %p516 = pneg %p515
      // Predicated region
      $region73: #{decoder_block_forward.4} parent=5 // pred_check
        _
      $region74: #{decoder_block_forward.4} parent=5 // pred_check_branch
        %518 = sbr.rel (%p515) target = $region76
      $region75: #{decoder_block_forward.4} parent=5 // pred_region
        %s519 = ssub.s32 %s25, 1
        // Predicated region
        $region77: #{decoder_block_forward.4} parent=75 // pred_check
          %p520 = pneg %p124
        $region78: #{decoder_block_forward.4} parent=75 // pred_check_branch
          %522 = sbr.rel (%p520) target = $region80
        $region79: #{decoder_block_forward.4} parent=75 // pred_region
          %524 = dma.done [#allocation3], 256
        $region80: #{decoder_block_forward.4} parent=75 // pred_fallthru
          _
        // Predicated region
        $region81: #{decoder_block_forward.4} parent=75 // pred_check
          %p525 = pneg %p145
        $region82: #{decoder_block_forward.4} parent=75 // pred_check_branch
          %527 = sbr.rel (%p525) target = $region84
        $region83: #{decoder_block_forward.4} parent=75 // pred_region
          %529 = dma.done [#allocation5], 16
        $region84: #{decoder_block_forward.4} parent=75 // pred_fallthru
          _
        // Predicated region
        $region85: #{decoder_block_forward.4} parent=75 // pred_check
          %p530 = pneg %p166
        $region86: #{decoder_block_forward.4} parent=75 // pred_check_branch
          %532 = sbr.rel (%p530) target = $region88
        $region87: #{decoder_block_forward.4} parent=75 // pred_region
          %534 = dma.done [#allocation5], 256
        $region88: #{decoder_block_forward.4} parent=75 // pred_fallthru
          _
        // Predicated region
        $region89: #{decoder_block_forward.4} parent=75 // pred_check
          %p535 = pneg %p187
        $region90: #{decoder_block_forward.4} parent=75 // pred_check_branch
          %537 = sbr.rel (%p535) target = $region92
        $region91: #{decoder_block_forward.4} parent=75 // pred_region
          %539 = dma.done [#allocation8], 16
        $region92: #{decoder_block_forward.4} parent=75 // pred_fallthru
          _
        // Predicated region
        $region93: #{decoder_block_forward.4} parent=75 // pred_check
          %p540 = pneg %p208
        $region94: #{decoder_block_forward.4} parent=75 // pred_check_branch
          %542 = sbr.rel (%p540) target = $region96
        $region95: #{decoder_block_forward.4} parent=75 // pred_region
          %544 = dma.done [#allocation8], 256
        $region96: #{decoder_block_forward.4} parent=75 // pred_fallthru
          _
        // Predicated region
        $region97: #{decoder_block_forward.4} parent=75 // pred_check
          %p545 = pneg %p229
        $region98: #{decoder_block_forward.4} parent=75 // pred_check_branch
          %547 = sbr.rel (%p545) target = $region100
        $region99: #{decoder_block_forward.4} parent=75 // pred_region
          %549 = dma.done [#allocation11], 16
        $region100: #{decoder_block_forward.4} parent=75 // pred_fallthru
          _
        // Predicated region
        $region101: #{decoder_block_forward.4} parent=75 // pred_check
          %p550 = pneg %p271
        $region102: #{decoder_block_forward.4} parent=75 // pred_check_branch
          %552 = sbr.rel (%p550) target = $region104
        $region103: #{decoder_block_forward.4} parent=75 // pred_region
          %554 = dma.done [#allocation11], 256
        $region104: #{decoder_block_forward.4} parent=75 // pred_fallthru
          _
        // Predicated region
        $region105: #{decoder_block_forward.4} parent=75 // pred_check
          %p555 = pneg %p292
        $region106: #{decoder_block_forward.4} parent=75 // pred_check_branch
          %557 = sbr.rel (%p555) target = $region108
        $region107: #{decoder_block_forward.4} parent=75 // pred_region
          %559 = dma.done [#allocation14], 16
        $region108: #{decoder_block_forward.4} parent=75 // pred_fallthru
          _
        %p560 = scmp.lt.s32.totalorder %s30, 1
        %s561 = scalar_select %p560, %s30, 1
        %s562 = smul.addr %s561, 8
        %s563 = scalar_lea.vmem %s0, %s562
        %p564 = pneg %p51
        %p565 = pneg %p48
        %p566 = scmp.lt.s32.totalorder %s30, 1
        %s567 = scalar_select %p566, %s30, 1
        %s568 = smul.addr %s567, 8
        %s569 = scalar_lea.vmem %s1, %s568
        %p570 = pneg %p77
        %p571 = pneg %p74
        %p572 = scmp.lt.s32.totalorder %s30, 1
        %s573 = scalar_select %p572, %s30, 1
        %s574 = smul.addr %s573, 8
        %s575 = scalar_lea.vmem %s2, %s574
        %p576 = pneg %p103
        %p577 = pneg %p100
        %p578 = pneg %p124
        %p579 = pneg %p121
        %p580 = pneg %p145
        %p581 = pneg %p142
        %p582 = pneg %p166
        %p583 = pneg %p163
        %p584 = pneg %p187
        %p585 = pneg %p184
        %p586 = pneg %p208
        %p587 = pneg %p205
        %p588 = pneg %p229
        %p589 = pneg %p226
        %p590 = pneg %p250
        %p591 = pneg %p247
        %p592 = pneg %p271
        %p593 = pneg %p268
        %p594 = pneg %p292
        %p595 = pneg %p289
        %p596 = pneg %p313
        %p597 = pneg %p310
        %p598 = pneg %p334
        %p599 = pneg %p331
        %p600 = pneg %p360
        %p601 = pneg %p357
        %p602 = scmp.lt.s32.totalorder %s30, 1
        %s603 = scalar_select %p602, %s30, 1
        %s604 = smul.addr %s603, 8
        %s605 = scalar_lea.vmem %s14, %s604
        %p606 = scmp.lt.s32.totalorder %s30, 1
        %s607 = scalar_select %p606, %s30, 1
        %s608 = smul.addr %s607, 8
        %s609 = scalar_lea.vmem %s0, %s608
        %p610 = scmp.lt.s32.totalorder %s30, 1
        %s611 = scalar_select %p610, %s30, 1
        %s612 = smul.addr %s611, 8
        %s613 = scalar_lea.vmem %s1, %s612
        %p614 = scmp.lt.s32.totalorder %s30, 1
        %s615 = scalar_select %p614, %s30, 1
        %s616 = smul.addr %s615, 8
        %s617 = scalar_lea.vmem %s2, %s616
        %p618 = scmp.lt.s32.totalorder %s30, 1
        %s619 = scalar_select %p618, %s30, 1
        %s620 = smul.addr %s619, 8
        %s621 = scalar_lea.vmem %s14, %s620
        %v623 = vld [vmem:[%s609] sm:$0xff]
        %v624 = vld [vmem:[%s613] sm:$0xff]
        %v625 = vld [vmem:[%s617] sm:$0xff]
        %v626 = vpack.c.bf16 %v623, %v623
        %v627 = vpack.c.bf16 %v624, %v624
        %v628 = vpack.c.bf16 %v625, %v625
        %v629 = vld [vmem:[#allocation2] sm:$0xf]
        %v630 = vld [vmem:[#allocation2 + $0x4] sm:$0xf]
        %v631 = vld [vmem:[#allocation2 + $0x8] sm:$0xf]
        %v632 = vld [vmem:[#allocation2 + $0xc] sm:$0xf]
        %v633 = vld [vmem:[#allocation4] sm:$0x1]
        %v635 = vperm.slane %v633, 0
        %v641 = vunpack.c.l.b16 %v629
        %v642 = vunpack.c.l.b16 %v630
        %v643 = vunpack.c.l.b16 %v631
        %v644 = vunpack.c.l.b16 %v632
        %v645 = vpack.c.b16 %v642, %v641
        %v646 = vpack.c.b16 %v644, %v643
        %vm649 = vcmask 261120
        %v651 = vsel %vm649, %v626, 0
        %653 = vmatpush.bf16.msra.mxu0 0
        %654 = vmatpush.bf16.msra.mxu0 0
        %655 = vmatpush.bf16.msra.mxu0 0
        %656 = vmatpush.bf16.msra.mxu0 0
        %657 = vmatpush.bf16.msra.mxu0 0
        %658 = vmatpush.bf16.msra.mxu0 0
        %659 = vmatpush.bf16.msra.mxu0 %v646
        %660 = vmatpush.bf16.msra.mxu0 %v645
        %661 = vmatmul.bf16.gmra.mxu0 %v651
        %v662 = vpop.f32.mrf.mxu0
        %v663 = vadd.f32 %v635, %v662
        %v664 = vpop.f32.mrf.mxu0
        %665 = vdwg.mxu0
        %v666 = vmax.f32 %v663, 0.0
        %v667 = vadd.f32 %v666, 0.001
        %v668 = vld [vmem:[#allocation6] sm:$0xf]
        %v669 = vld [vmem:[#allocation6 + $0x4] sm:$0xf]
        %v670 = vld [vmem:[#allocation6 + $0x8] sm:$0xf]
        %v671 = vld [vmem:[#allocation6 + $0xc] sm:$0xf]
        %v672 = vld [vmem:[#allocation7] sm:$0x1]
        %v674 = vperm.slane %v672, 0
        %v680 = vunpack.c.l.b16 %v668
        %v681 = vunpack.c.l.b16 %v669
        %v682 = vunpack.c.l.b16 %v670
        %v683 = vunpack.c.l.b16 %v671
        %v684 = vpack.c.b16 %v681, %v680
        %v685 = vpack.c.b16 %v683, %v682
        %v689 = vsel %vm649, %v627, 0
        %691 = vmatpush.bf16.msra.mxu0 0
        %692 = vmatpush.bf16.msra.mxu0 0
        %693 = vmatpush.bf16.msra.mxu0 0
        %694 = vmatpush.bf16.msra.mxu0 0
        %695 = vmatpush.bf16.msra.mxu0 0
        %696 = vmatpush.bf16.msra.mxu0 0
        %697 = vmatpush.bf16.msra.mxu0 %v685
        %698 = vmatpush.bf16.msra.mxu0 %v684
        %699 = vmatmul.bf16.gmra.mxu0 %v689
        %v700 = vpop.f32.mrf.mxu0
        %v701 = vadd.f32 %v674, %v700
        %v702 = vpop.f32.mrf.mxu0
        %703 = vdwg.mxu0
        %v704 = vmax.f32 %v701, 0.0
        %v705 = vadd.f32 %v704, 0.001
        %v706 = vld [vmem:[#allocation9] sm:$0xf]
        %v707 = vld [vmem:[#allocation9 + $0x4] sm:$0xf]
        %v708 = vld [vmem:[#allocation9 + $0x8] sm:$0xf]
        %v709 = vld [vmem:[#allocation9 + $0xc] sm:$0xf]
        %v710 = vld [vmem:[#allocation10] sm:$0x1]
        %v712 = vperm.slane %v710, 0
        %v718 = vunpack.c.l.b16 %v706
        %v719 = vunpack.c.l.b16 %v707
        %v720 = vunpack.c.l.b16 %v708
        %v721 = vunpack.c.l.b16 %v709
        %v722 = vpack.c.b16 %v719, %v718
        %v723 = vpack.c.b16 %v721, %v720
        %v727 = vsel %vm649, %v628, 0
        %729 = vmatpush.bf16.msra.mxu0 0
        %730 = vmatpush.bf16.msra.mxu0 0
        %731 = vmatpush.bf16.msra.mxu0 0
        %732 = vmatpush.bf16.msra.mxu0 0
        %733 = vmatpush.bf16.msra.mxu0 0
        %734 = vmatpush.bf16.msra.mxu0 0
        %735 = vmatpush.bf16.msra.mxu0 %v723
        %736 = vmatpush.bf16.msra.mxu0 %v722
        %737 = vmatmul.bf16.gmra.mxu0 %v727
        %v738 = vpop.f32.mrf.mxu0
        %v739 = vadd.f32 %v712, %v738
        %v740 = vpop.f32.mrf.mxu0
        %741 = vdwg.mxu0
        %vm742 = vcmask 523264
        %v743 = vsel %vm742, %v705, 0.0
        %v744 = vrot.slane %v743, 4
        %v745 = vadd.f32 %v743, %v744
        %v746 = vrot.slane %v745, 2
        %v747 = vadd.f32 %v745, %v746
        %v748 = vrot.slane %v747, 1
        %v749 = vadd.f32 %v747, %v748
        %v750 = vmul.f32 %v667, %v749
        %v751 = vpack.c.bf16 %v750, %v750
        %v752 = vld [vmem:[%s9] sm:$0xf]
        %v753 = vld [vmem:[%s9 + $0x4] sm:$0xf]
        %v754 = vld [vmem:[%s9 + $0x8] sm:$0xf]
        %v755 = vld [vmem:[%s9 + $0xc] sm:$0xf]
        %v756 = vld [vmem:[%s9 + $0x10] sm:$0xf]
        %v757 = vld [vmem:[%s9 + $0x14] sm:$0xf]
        %v758 = vld [vmem:[%s9 + $0x18] sm:$0xf]
        %v759 = vld [vmem:[%s9 + $0x1c] sm:$0xf]
        %v768 = vunpack.c.l.b16 %v752
        %v769 = vunpack.c.l.b16 %v753
        %v770 = vunpack.c.l.b16 %v754
        %v771 = vunpack.c.l.b16 %v755
        %v772 = vunpack.c.l.b16 %v756
        %v773 = vunpack.c.l.b16 %v757
        %v774 = vunpack.c.l.b16 %v758
        %v775 = vunpack.c.l.b16 %v759
        %v776 = vpack.c.b16 %v769, %v768
        %v777 = vpack.c.b16 %v771, %v770
        %v778 = vpack.c.b16 %v773, %v772
        %v779 = vpack.c.b16 %v775, %v774
        %v785 = vsel %vm742, %v751, 0
        %787 = vmatpush.bf16.msra.mxu0 0
        %788 = vmatpush.bf16.msra.mxu0 0
        %789 = vmatpush.bf16.msra.mxu0 0
        %790 = vmatpush.bf16.msra.mxu0 0
        %791 = vmatpush.bf16.msra.mxu0 %v779
        %792 = vmatpush.bf16.msra.mxu0 %v778
        %793 = vmatpush.bf16.msra.mxu0 %v777
        %794 = vmatpush.bf16.msra.mxu0 %v776
        %795 = vmatmul.bf16.gmra.mxu0 %v785
        %v796 = vpop.f32.mrf.mxu0
        %v797 = vadd.f32 0.0, %v796
        %v798 = vpop.f32.mrf.mxu0
        %799 = vdwg.mxu0
        %v800 = vrcp.pop %v797
        %v801 = vpack.c.bf16 %v705, %v705
        %v802 = vpack.c.bf16 %v739, %v739
        %803 = vxpose.xlu0.c.b16.start [1/8] %v801, 128
        %804 = vxpose.xlu0.c.b16.cont [2/8] 0, 128
        %805 = vxpose.xlu0.c.b16.cont [3/8] 0, 128
        %806 = vxpose.xlu0.c.b16.cont [4/8] 0, 128
        %807 = vxpose.xlu0.c.b16.cont [5/8] 0, 128
        %808 = vxpose.xlu0.c.b16.cont [6/8] 0, 128
        %809 = vxpose.xlu0.c.b16.cont [7/8] 0, 128
        %810 = vxpose.xlu0.c.b16.end [8/8] 0, 128
        %v811 = vpop.trf.xlu0
        %v812 = vpop.trf.xlu0
        %v813 = vpop.trf.xlu0
        %v814 = vpop.trf.xlu0
        %v815 = vpop.trf.xlu0
        %v816 = vpop.trf.xlu0
        %v817 = vpop.trf.xlu0
        %v818 = vpop.trf.xlu0
        %vm819 = vcmask 64512
        %v821 = vsel %vm819, %v811, 0
        %v824 = vsel %vm819, %v812, 0
        %v827 = vsel %vm819, %v813, 0
        %v830 = vsel %vm819, %v814, 0
        %vm832 = vcmask 1043456
        %v834 = vsel %vm832, %v802, 0
        %836 = vmatpush.bf16.msra.mxu0 0
        %837 = vmatpush.bf16.msra.mxu0 0
        %838 = vmatpush.bf16.msra.mxu0 0
        %839 = vmatpush.bf16.msra.mxu0 0
        %840 = vmatpush.bf16.msra.mxu0 0
        %841 = vmatpush.bf16.msra.mxu0 0
        %842 = vmatpush.bf16.msra.mxu0 0
        %843 = vmatpush.bf16.msra.mxu0 %v834
        %844 = vmatmul.bf16.gmra.mxu0 %v821
        %v845 = vpop.f32.mrf.mxu0
        %v846 = vadd.f32 0.0, %v845
        %v847 = vpop.f32.mrf.mxu0
        %v848 = vadd.f32 0.0, %v847
        %849 = vmatmul.bf16.gmra.mxu0 %v824
        %v850 = vpop.f32.mrf.mxu0
        %v851 = vadd.f32 0.0, %v850
        %v852 = vpop.f32.mrf.mxu0
        %v853 = vadd.f32 0.0, %v852
        %854 = vmatmul.bf16.gmra.mxu0 %v827
        %v855 = vpop.f32.mrf.mxu0
        %v856 = vadd.f32 0.0, %v855
        %v857 = vpop.f32.mrf.mxu0
        %v858 = vadd.f32 0.0, %v857
        %859 = vmatmul.bf16.gmra.mxu0 %v830
        %v860 = vpop.f32.mrf.mxu0
        %v861 = vadd.f32 0.0, %v860
        %v862 = vpop.f32.mrf.mxu0
        %v863 = vadd.f32 0.0, %v862
        %864 = vdwg.mxu0
        %v865 = vpack.c.bf16 %v846, %v846
        %v866 = vpack.c.bf16 %v848, %v848
        %v867 = vpack.c.bf16 %v851, %v851
        %v868 = vpack.c.bf16 %v853, %v853
        %v869 = vpack.c.bf16 %v856, %v856
        %v870 = vpack.c.bf16 %v858, %v858
        %v871 = vpack.c.bf16 %v861, %v861
        %v872 = vpack.c.bf16 %v863, %v863
        %v873 = vunpack.c.l.bf16 %v865
        %v874 = vunpack.c.l.bf16 %v866
        %v875 = vunpack.c.l.bf16 %v867
        %v876 = vunpack.c.l.bf16 %v868
        %v877 = vunpack.c.l.bf16 %v869
        %v878 = vunpack.c.l.bf16 %v870
        %v879 = vunpack.c.l.bf16 %v871
        %v880 = vunpack.c.l.bf16 %v872
        %v881 = vunpack.c.l.bf16 %v752
        %v882 = vunpack.c.l.bf16 %v753
        %v883 = vunpack.c.l.bf16 %v754
        %v884 = vunpack.c.l.bf16 %v755
        %v885 = vunpack.c.l.bf16 %v756
        %v886 = vunpack.c.l.bf16 %v757
        %v887 = vunpack.c.l.bf16 %v758
        %v888 = vunpack.c.l.bf16 %v759
        %v889 = vmul.f32 %v873, %v881
        %v890 = vmul.f32 %v874, %v882
        %v891 = vmul.f32 %v875, %v883
        %v892 = vmul.f32 %v876, %v884
        %v893 = vmul.f32 %v877, %v885
        %v894 = vmul.f32 %v878, %v886
        %v895 = vmul.f32 %v879, %v887
        %v896 = vmul.f32 %v880, %v888
        %v897 = vpack.c.bf16 %v890, %v889
        %v898 = vpack.c.bf16 %v892, %v891
        %v899 = vpack.c.bf16 %v894, %v893
        %v900 = vpack.c.bf16 %v896, %v895
        %v901 = vpack.c.bf16 %v667, %v667
        %v903 = vsel %vm742, %v901, 0
        %905 = vmatpush.bf16.msra.mxu0 0
        %906 = vmatpush.bf16.msra.mxu0 0
        %907 = vmatpush.bf16.msra.mxu0 0
        %908 = vmatpush.bf16.msra.mxu0 0
        %909 = vmatpush.bf16.msra.mxu0 %v900
        %910 = vmatpush.bf16.msra.mxu0 %v899
        %911 = vmatpush.bf16.msra.mxu0 %v898
        %912 = vmatpush.bf16.msra.mxu0 %v897
        %913 = vmatmul.bf16.gmra.mxu0 %v903
        %v914 = vpop.f32.mrf.mxu0
        %v915 = vadd.f32 0.0, %v914
        %v916 = vpop.f32.mrf.mxu0
        %917 = vdwg.mxu0
        %v918 = vmul.f32 %v915, %v800
        %v919 = vpack.c.bf16 %v918, %v918
        %v920 = vld [vmem:[#allocation12] sm:$0xf]
        %v921 = vld [vmem:[#allocation12 + $0x4] sm:$0xf]
        %v922 = vld [vmem:[#allocation12 + $0x8] sm:$0xf]
        %v923 = vld [vmem:[#allocation12 + $0xc] sm:$0xf]
        %v924 = vld [vmem:[#allocation13] sm:$0x1]
        %v926 = vperm.slane %v924, 0
        %v932 = vunpack.c.l.b16 %v920
        %v933 = vunpack.c.l.b16 %v921
        %v934 = vunpack.c.l.b16 %v922
        %v935 = vunpack.c.l.b16 %v923
        %v936 = vpack.c.b16 %v933, %v932
        %v937 = vpack.c.b16 %v935, %v934
        %v941 = vsel %vm649, %v919, 0
        %943 = vmatpush.bf16.msra.mxu0 0
        %944 = vmatpush.bf16.msra.mxu0 0
        %945 = vmatpush.bf16.msra.mxu0 0
        %946 = vmatpush.bf16.msra.mxu0 0
        %947 = vmatpush.bf16.msra.mxu0 0
        %948 = vmatpush.bf16.msra.mxu0 0
        %949 = vmatpush.bf16.msra.mxu0 %v937
        %950 = vmatpush.bf16.msra.mxu0 %v936
        %951 = vmatmul.bf16.gmra.mxu0 %v941
        %v952 = vpop.f32.mrf.mxu0
        %v953 = vadd.f32 %v926, %v952
        %v954 = vpop.f32.mrf.mxu0
        %955 = vdwg.mxu0
        %v956 = vadd.f32 %v953, %v623
        %v957 = vld [vmem:[%s12] sm:$0x1]
        %v958 = vld [vmem:[%s13] sm:$0x1]
        %v959 = vsel %vm649, %v956, 0.0
        %960 = vadd.xlane.f32.xlu0 %v959
        %v961 = vpop.xlane.xlu0 %960
        %v962 = vrcp.pop 32.0
        %v963 = vmul.f32 32.0, %v962
        %v964 = vsub.f32 1.0, %v963
        %v965 = vmul.f32 %v962, %v964
        %v966 = vadd.f32 %v962, %v965
        %vm967 = vweird.f32 %v962
        %v968 = vsel %vm967, %v962, %v966
        %v969 = vmul.f32 %v961, %v968
        %v970 = vsub.f32 %v956, %v969
        %v971 = vmul.f32 %v970, %v970
        %v972 = vsel %vm649, %v971, 0.0
        %973 = vadd.xlane.f32.xlu0 %v972
        %v974 = vpop.xlane.xlu0 %973
        %v975 = vmul.f32 %v974, %v968
        %v976 = vadd.f32 %v975, 1e-05
        %v977 = vrsqrt.pop %v976
        %v978 = vmul.f32 %v977, %v976
        %v979 = vmul.f32 %v978, %v977
        %v980 = vmul.f32 0.5, %v979
        %v981 = vsub.f32 1.5, %v980
        %v982 = vmul.f32 %v977, %v981
        %vm983 = vweird.f32 %v976
        %vm984 = vweird.f32 %v977
        %vm985 = vmor %vm983, %vm984
        %v986 = vsel %vm985, %v977, %v982
        %v987 = vmul.f32 %v970, %v986
        %v989 = vperm.slane %v957, 0
        %v991 = vmul.f32 %v987, %v989
        %v993 = vperm.slane %v958, 0
        %v995 = vadd.f32 %v991, %v993
        %996 = vst.msk [vmem:[%s621] sm:$0xff] %vm649, %v995
        %p997 = scmp.lt.s32.totalorder %s30, 1
        %s998 = scalar_select %p997, %s30, 1
        %s999 = smul.addr %s998, 8
        %s1000 = scalar_lea.vmem %s14, %s999
        // Predicated region
        $region109: #{decoder_block_forward.4} parent=75 // pred_check
          %p1001 = pneg %p357
        $region110: #{decoder_block_forward.4} parent=75 // pred_check_branch
          %1003 = sbr.rel (%p1001) target = $region112
        $region111: #{decoder_block_forward.4} parent=75 // pred_region
          _
        $region112: #{decoder_block_forward.4} parent=75 // pred_fallthru
          _
      $region76: #{decoder_block_forward.4} parent=5 // pred_fallthru
        _
      %p1004 = scmp.le.s32.totalorder 2, %s25
      // Predicated region
      $region113: #{decoder_block_forward.4} parent=5 // pred_check
        %p1005 = pneg %p1004
      $region114: #{decoder_block_forward.4} parent=5 // pred_check_branch
        %1007 = sbr.rel (%p1005) target = $region116
      $region115: #{decoder_block_forward.4} parent=5 // pred_region
        %s1008 = ssub.s32 %s25, 2
        // Predicated region
        $region117: #{decoder_block_forward.4} parent=115 // pred_check
          %p1009 = pneg %p363
        $region118: #{decoder_block_forward.4} parent=115 // pred_check_branch
          %1011 = sbr.rel (%p1009) target = $region120
        $region119: #{decoder_block_forward.4} parent=115 // pred_region
          %p1012 = scmp.lt.s32.totalorder %s31, 1
          %s1013 = scalar_select %p1012, %s31, 1
          %s1014 = smul.addr %s1013, 8
          %s1015 = scalar_lea.vmem %s14, %s1014
        $region120: #{decoder_block_forward.4} parent=115 // pred_fallthru
          _
      $region116: #{decoder_block_forward.4} parent=5 // pred_fallthru
        _
    $region6: #{decoder_block_forward.4} parent=1 // loop_footer
      %s29 = sadd.s32 1, %s25
    $region7: #{decoder_block_forward.4} parent=1 // loop_footer_branch
      %24 = sbr.rel target = $region3
    $region8: #{decoder_block_forward.4} parent=1 // loop_exit
      _
    %1016 = vsyncpa [#allocation3], 1
    %s1017 = scalar_lea.sflag [#allocation3], 1
    %1018 = vsyncpa %s1017, 1
    %1019 = vsyncpa [#allocation5], 1
    %1020 = vsyncpa [#allocation8], 1
    %1021 = vsyncpa [#allocation11], 1
    %1022 = vsyncpa [#allocation14], 1

// kernel: decoder_block_forward.5
$region0: #{decoder_block_forward.5}
  #allocation0 [shape = 'u32[]', space=smem, size = 0x4, offset = 0x4, fixed_abs, tag = 'smem constant byte address 0x4 - core index']
  #allocation1 [shape = 'u32[72,128]{1,0:T(1,128)}', space=vmem, size = 0x9000, scoped, tag = 'internal scratch']
  #allocation2 [shape = 'f32[16,32]{1,0:T(8,128)}', space=vmem, size = 0x2000, scoped, tag = 'scratch operand']
  %s0 = inlined_call_operand.vmem [shape: f32[16,32], index: 0, kind: input, shape index: {}]
  %s1 = inlined_call_operand.vmem [shape: bf16[32,64], index: 1, kind: input, shape index: {}]
  %s2 = inlined_call_operand.vmem [shape: f32[1,64], index: 2, kind: input, shape index: {}]
  %s3 = inlined_call_operand.vmem [shape: bf16[64,32], index: 3, kind: input, shape index: {}]
  %s4 = inlined_call_operand.vmem [shape: f32[1,32], index: 4, kind: input, shape index: {}]
  %s5 = inlined_call_operand.vmem [shape: f32[1,32], index: 5, kind: input, shape index: {}]
  %s6 = inlined_call_operand.vmem [shape: f32[1,32], index: 6, kind: input, shape index: {}]
  %s7 = inlined_call_operand.hbm [shape: f32[16,32], index: 7, kind: output, shape index: {}]
  %s8 = sld [smem:[#allocation0]]
  $region46: #{decoder_block_forward.5} parent=0
    _
  %s10 = ssub.s32 1, %s8
  %s11 = scalar_select 0, %s10, %s8
  $region1: #{decoder_block_forward.5} parent=0
    #allocation3 [shape = 'u8[8192]{0}', space=vmem, size = 0x2000, scoped, tag = 'output window, operand 0, single buffered']
    #allocation4 [shape = 's32[1]{0}', space=sflag, size = 0x4, scoped, tag = 'scoped memory for decoder_block_forward.5']
    %12 = vsyncpa [#allocation4], 0
    // Predicated region
    $region2: #{decoder_block_forward.5} parent=1 // pred_check
      _
    $region3: #{decoder_block_forward.5} parent=1 // pred_check_branch
      %14 = sbr.rel (0) target = $region5
    $region4: #{decoder_block_forward.5} parent=1 // pred_region
      _
    $region5: #{decoder_block_forward.5} parent=1 // pred_fallthru
      _
    // Predicated region
    $region6: #{decoder_block_forward.5} parent=1 // pred_check
      _
    $region7: #{decoder_block_forward.5} parent=1 // pred_check_branch
      %16 = sbr.rel (0) target = $region9
    $region8: #{decoder_block_forward.5} parent=1 // pred_region
      _
    $region9: #{decoder_block_forward.5} parent=1 // pred_fallthru
      _
    // Predicated region
    $region10: #{decoder_block_forward.5} parent=1 // pred_check
      _
    $region11: #{decoder_block_forward.5} parent=1 // pred_check_branch
      %18 = sbr.rel (0) target = $region13
    $region12: #{decoder_block_forward.5} parent=1 // pred_region
      _
    $region13: #{decoder_block_forward.5} parent=1 // pred_fallthru
      _
    // Predicated region
    $region14: #{decoder_block_forward.5} parent=1 // pred_check
      _
    $region15: #{decoder_block_forward.5} parent=1 // pred_check_branch
      %20 = sbr.rel (0) target = $region17
    $region16: #{decoder_block_forward.5} parent=1 // pred_region
      _
    $region17: #{decoder_block_forward.5} parent=1 // pred_fallthru
      _
    // Predicated region
    $region18: #{decoder_block_forward.5} parent=1 // pred_check
      _
    $region19: #{decoder_block_forward.5} parent=1 // pred_check_branch
      %22 = sbr.rel (0) target = $region21
    $region20: #{decoder_block_forward.5} parent=1 // pred_region
      _
    $region21: #{decoder_block_forward.5} parent=1 // pred_fallthru
      _
    // Predicated region
    $region22: #{decoder_block_forward.5} parent=1 // pred_check
      _
    $region23: #{decoder_block_forward.5} parent=1 // pred_check_branch
      %24 = sbr.rel (0) target = $region25
    $region24: #{decoder_block_forward.5} parent=1 // pred_region
      _
    $region25: #{decoder_block_forward.5} parent=1 // pred_fallthru
      _
    // Predicated region
    $region26: #{decoder_block_forward.5} parent=1 // pred_check
      _
    $region27: #{decoder_block_forward.5} parent=1 // pred_check_branch
      %26 = sbr.rel (0) target = $region29
    $region28: #{decoder_block_forward.5} parent=1 // pred_region
      _
    $region29: #{decoder_block_forward.5} parent=1 // pred_fallthru
      _
    %p28 = scmp.eq.s32.totalorder 0, 0
    // Predicated region
    $region30: #{decoder_block_forward.5} parent=1 // pred_check
      %p29 = pneg %p28
    $region31: #{decoder_block_forward.5} parent=1 // pred_check_branch
      %31 = sbr.rel (%p29) target = $region33
    $region32: #{decoder_block_forward.5} parent=1 // pred_region
      %vm32 = vcmask 261120
      %33 = vst.msk [vmem:[#allocation2] sm:$0xff] %vm32, 0.0
      %34 = vst.msk [vmem:[#allocation2 + $0x8] sm:$0xff] %vm32, 0.0
    $region33: #{decoder_block_forward.5} parent=1 // pred_fallthru
      _
    %v35 = vld [vmem:[%s0] sm:$0xff]
    %v36 = vld [vmem:[%s0 + $0x8] sm:$0xff]
    %v37 = vpack.c.bf16 %v36, %v35
    %v38 = vld [vmem:[%s1] sm:$0xf]
    %v39 = vld [vmem:[%s1 + $0x4] sm:$0xf]
    %v40 = vld [vmem:[%s1 + $0x8] sm:$0xf]
    %v41 = vld [vmem:[%s1 + $0xc] sm:$0xf]
    %v42 = vld [vmem:[%s2] sm:$0x1]
    %v44 = vperm.slane %v42, 0
    %v50 = vunpack.c.l.b16 %v38
    %v51 = vunpack.c.l.b16 %v39
    %v52 = vunpack.c.l.b16 %v40
    %v53 = vunpack.c.l.b16 %v41
    %v54 = vpack.c.b16 %v51, %v50
    %v55 = vpack.c.b16 %v53, %v52
    %vm58 = vcmask 261120
    %v60 = vsel %vm58, %v37, 0
    %62 = vmatpush.bf16.msra.mxu0 0
    %63 = vmatpush.bf16.msra.mxu0 0
    %64 = vmatpush.bf16.msra.mxu0 0
    %65 = vmatpush.bf16.msra.mxu0 0
    %66 = vmatpush.bf16.msra.mxu0 0
    %67 = vmatpush.bf16.msra.mxu0 0
    %68 = vmatpush.bf16.msra.mxu0 %v55
    %69 = vmatpush.bf16.msra.mxu0 %v54
    %70 = vmatmul.bf16.gmra.mxu0 %v60
    %v71 = vpop.f32.mrf.mxu0
    %v72 = vadd.f32 %v44, %v71
    %v73 = vpop.f32.mrf.mxu0
    %v74 = vadd.f32 %v44, %v73
    %75 = vdwg.mxu0
    %v76 = vmul.f32 %v72, %v72
    %v77 = vmul.f32 %v74, %v74
    %v78 = vmul.f32 %v72, %v76
    %v79 = vmul.f32 %v74, %v77
    %v80 = vmul.f32 %v78, 0.044715
    %v81 = vmul.f32 %v79, 0.044715
    %v82 = vadd.f32 %v72, %v80
    %v83 = vadd.f32 %v74, %v81
    %v84 = vmul.f32 %v82, 0.7978846
    %v85 = vmul.f32 %v83, 0.7978846
    %v86 = vtanh.pop %v84
    %v87 = vtanh.pop %v85
    %v88 = vadd.f32 %v86, 1.0
    %v89 = vadd.f32 %v87, 1.0
    %v90 = vmul.f32 %v88, 0.5
    %v91 = vmul.f32 %v89, 0.5
    %v92 = vmul.f32 %v72, %v90
    %v93 = vmul.f32 %v74, %v91
    %v94 = vld [vmem:[#allocation2] sm:$0xff]
    %v95 = vld [vmem:[#allocation2 + $0x8] sm:$0xff]
    %v96 = vpack.c.bf16 %v93, %v92
    %v97 = vld [vmem:[%s3] sm:$0xf]
    %v98 = vld [vmem:[%s3 + $0x4] sm:$0xf]
    %v99 = vld [vmem:[%s3 + $0x8] sm:$0xf]
    %v100 = vld [vmem:[%s3 + $0xc] sm:$0xf]
    %v101 = vld [vmem:[%s3 + $0x10] sm:$0xf]
    %v102 = vld [vmem:[%s3 + $0x14] sm:$0xf]
    %v103 = vld [vmem:[%s3 + $0x18] sm:$0xf]
    %v104 = vld [vmem:[%s3 + $0x1c] sm:$0xf]
    %v113 = vunpack.c.l.b16 %v97
    %v114 = vunpack.c.l.b16 %v98
    %v115 = vunpack.c.l.b16 %v99
    %v116 = vunpack.c.l.b16 %v100
    %v117 = vunpack.c.l.b16 %v101
    %v118 = vunpack.c.l.b16 %v102
    %v119 = vunpack.c.l.b16 %v103
    %v120 = vunpack.c.l.b16 %v104
    %v121 = vpack.c.b16 %v114, %v113
    %v122 = vpack.c.b16 %v116, %v115
    %v123 = vpack.c.b16 %v118, %v117
    %v124 = vpack.c.b16 %v120, %v119
    %vm129 = vcmask 523264
    %v131 = vsel %vm129, %v96, 0
    %133 = vmatpush.bf16.msra.mxu0 0
    %134 = vmatpush.bf16.msra.mxu0 0
    %135 = vmatpush.bf16.msra.mxu0 0
    %136 = vmatpush.bf16.msra.mxu0 0
    %137 = vmatpush.bf16.msra.mxu0 %v124
    %138 = vmatpush.bf16.msra.mxu0 %v123
    %139 = vmatpush.bf16.msra.mxu0 %v122
    %140 = vmatpush.bf16.msra.mxu0 %v121
    %141 = vmatmul.bf16.gmra.mxu0 %v131
    %v142 = vpop.f32.mrf.mxu0
    %v143 = vadd.f32 0.0, %v142
    %v144 = vpop.f32.mrf.mxu0
    %v145 = vadd.f32 0.0, %v144
    %146 = vdwg.mxu0
    %v147 = vadd.f32 %v94, %v143
    %v148 = vadd.f32 %v95, %v145
    %149 = vst.msk [vmem:[#allocation2] sm:$0xff] %vm58, %v147
    %150 = vst.msk [vmem:[#allocation2 + $0x8] sm:$0xff] %vm58, %v148
    // Predicated region
    $region34: #{decoder_block_forward.5} parent=1 // pred_check
      %p151 = pneg %p28
    $region35: #{decoder_block_forward.5} parent=1 // pred_check_branch
      %153 = sbr.rel (%p151) target = $region37
    $region36: #{decoder_block_forward.5} parent=1 // pred_region
      %v154 = vld [vmem:[#allocation2] sm:$0xff]
      %v155 = vld [vmem:[#allocation2 + $0x8] sm:$0xff]
      %v156 = vld [vmem:[%s4] sm:$0x1]
      %v158 = vperm.slane %v156, 0
      %v160 = vadd.f32 %v154, %v158
      %v161 = vadd.f32 %v155, %v158
      %v162 = vadd.f32 %v160, %v35
      %v163 = vadd.f32 %v161, %v36
      %v164 = vld [vmem:[%s5] sm:$0x1]
      %v165 = vld [vmem:[%s6] sm:$0x1]
      %v166 = vsel %vm58, %v162, 0.0
      %167 = vadd.xlane.f32.xlu0 %v166
      %v168 = vpop.xlane.xlu0 %167
      %v169 = vsel %vm58, %v163, 0.0
      %170 = vadd.xlane.f32.xlu0 %v169
      %v171 = vpop.xlane.xlu0 %170
      %v172 = vrcp.pop 32.0
      %v173 = vmul.f32 32.0, %v172
      %v174 = vsub.f32 1.0, %v173
      %v175 = vmul.f32 %v172, %v174
      %v176 = vadd.f32 %v172, %v175
      %vm177 = vweird.f32 %v172
      %v178 = vsel %vm177, %v172, %v176
      %v179 = vmul.f32 %v168, %v178
      %v180 = vmul.f32 %v171, %v178
      %v181 = vsub.f32 %v162, %v179
      %v182 = vsub.f32 %v163, %v180
      %v183 = vmul.f32 %v181, %v181
      %v184 = vmul.f32 %v182, %v182
      %v185 = vsel %vm58, %v183, 0.0
      %186 = vadd.xlane.f32.xlu0 %v185
      %v187 = vpop.xlane.xlu0 %186
      %v188 = vsel %vm58, %v184, 0.0
      %189 = vadd.xlane.f32.xlu0 %v188
      %v190 = vpop.xlane.xlu0 %189
      %v191 = vmul.f32 %v187, %v178
      %v192 = vmul.f32 %v190, %v178
      %v193 = vadd.f32 %v191, 1e-05
      %v194 = vadd.f32 %v192, 1e-05
      %v195 = vrsqrt.pop %v193
      %v196 = vmul.f32 %v195, %v193
      %v197 = vmul.f32 %v196, %v195
      %v198 = vmul.f32 0.5, %v197
      %v199 = vsub.f32 1.5, %v198
      %v200 = vmul.f32 %v195, %v199
      %vm201 = vweird.f32 %v193
      %vm202 = vweird.f32 %v195
      %vm203 = vmor %vm201, %vm202
      %v204 = vsel %vm203, %v195, %v200
      %v205 = vrsqrt.pop %v194
      %v206 = vmul.f32 %v205, %v194
      %v207 = vmul.f32 %v206, %v205
      %v208 = vmul.f32 0.5, %v207
      %v209 = vsub.f32 1.5, %v208
      %v210 = vmul.f32 %v205, %v209
      %vm211 = vweird.f32 %v194
      %vm212 = vweird.f32 %v205
      %vm213 = vmor %vm211, %vm212
      %v214 = vsel %vm213, %v205, %v210
      %v215 = vmul.f32 %v181, %v204
      %v216 = vmul.f32 %v182, %v214
      %v218 = vperm.slane %v164, 0
      %v220 = vmul.f32 %v215, %v218
      %v221 = vmul.f32 %v216, %v218
      %v223 = vperm.slane %v165, 0
      %v225 = vadd.f32 %v220, %v223
      %v226 = vadd.f32 %v221, %v223
      %227 = vst.msk [vmem:[#allocation3] sm:$0xff] %vm58, %v225
      %228 = vst.msk [vmem:[#allocation3 + $0x8] sm:$0xff] %vm58, %v226
    $region37: #{decoder_block_forward.5} parent=1 // pred_fallthru
      _
    // Predicated region
    $region38: #{decoder_block_forward.5} parent=1 // pred_check
      _
    $region39: #{decoder_block_forward.5} parent=1 // pred_check_branch
      %230 = sbr.rel (0) target = $region41
    $region40: #{decoder_block_forward.5} parent=1 // pred_region
      %232 = vsyncadd [#allocation4], 0
      %s233 = sshll.u32 [#allocation3], 4
      %s234 = int_to_ptr.vmem [resolvable:$true] %s233
      %s235 = sshll.u32 %s7, 4
      %s236 = int_to_ptr.hbm [resolvable:$true] %s235
      %241 = dma.vmem_to_hbm [thread:$0]  %s234, 256, %s236, [#allocation4], 128, 128, 8
    $region41: #{decoder_block_forward.5} parent=1 // pred_fallthru
      _
    // Predicated region
    $region42: #{decoder_block_forward.5} parent=1 // pred_check
      _
    $region43: #{decoder_block_forward.5} parent=1 // pred_check_branch
      %243 = sbr.rel (0) target = $region45
    $region44: #{decoder_block_forward.5} parent=1 // pred_region
      %245 = dma.done [#allocation4], 256
    $region45: #{decoder_block_forward.5} parent=1 // pred_fallthru
      _
    %246 = vsyncpa [#allocation4], 1

</llo_original>
